<compile_context>
chip_gen: v5e
topology: v5e:2x2
jax: 0.10.0
libtpu: 0.0.40
codegen_flags: <defaults>
</compile_context>

<pallas_src>
import math
import functools
import warnings

import jax
import jax.numpy as jnp
from jax.experimental import pallas as pl
from jax.experimental.pallas import tpu as pltpu

_NEG_BIG = -1e30  # finite "minus infinity": keeps the online softmax NaN-free


def _round_up(x, m):
    return (x + m - 1) // m * m


# ----------------------------- tiled GEMM kernel -----------------------------

def _matmul_kernel(x_ref, w_ref, o_ref, acc_ref):
    # grid = (M//tm, N//tn, K//tk); K is the innermost ("arbitrary") reduction.
    @pl.when(pl.program_id(2) == 0)
    def _():
        acc_ref[...] = jnp.zeros_like(acc_ref)

    acc_ref[...] += jnp.dot(
        x_ref[...], w_ref[...], preferred_element_type=jnp.float32
    )

    @pl.when(pl.program_id(2) == pl.num_programs(2) - 1)
    def _():
        o_ref[...] = acc_ref[...].astype(o_ref.dtype)


@functools.lru_cache(maxsize=1)
def _gemm_tile_defaults():
    """Per-generation prefill GEMM tiles (arithmetic intensity tm*tn/(tm+tn)).

    v5e:  needs ~240 elem  -> 512x512   (256)
    v7x:  needs ~310 elem  -> 512x768   (307), comfortably inside 64 MiB VMEM
    v6e:  needs ~640 elem  -> 1024x1024 (512), best compromise w/ VMEM headroom
    """
    try:
        kind = jax.devices()[0].device_kind.lower()
    except Exception:  # pragma: no cover - defensive
        kind = ""
    if "v6" in kind:
        return 1024, 1024, 512
    if "v7" in kind:
        return 512, 768, 512
    return 512, 512, 512  # v5e and default


def linear_pallas(x2d, w, tm=None, tn=None, tk=None):
    """y = x2d @ w (w stored (in, out)).  bf16 in, f32 VMEM accumulate, bf16 out."""
    M, K = x2d.shape
    K2, N = w.shape
    assert K == K2

    dtm, dtn, dtk = _gemm_tile_defaults()
    tm = tm or dtm
    tn = tn or dtn
    tk = tk or dtk

    # Decode / small-M regime: the GEMM is weight-read bound.  Stream the
    # weight through in as few, as-wide-as-possible tiles as VMEM allows
    # (fewer grid steps, weights read exactly once).
    if M <= 256:
        tn = max(tn, 2048)
        tk = max(tk, 1024)

    # bf16 packs 16 rows per vreg -> round row tiles to 16 (not 8).
    tm = min(tm, _round_up(M, 16))
    tn = min(tn, _round_up(N, 128))
    tk = min(tk, _round_up(K, 128))
    Mp, Kp, Np = _round_up(M, tm), _round_up(K, tk), _round_up(N, tn)

    xp = x2d if (Mp == M and Kp == K) else jnp.pad(x2d, ((0, Mp - M), (0, Kp - K)))
    wp = w if (Kp == K and Np == N) else jnp.pad(w, ((0, Kp - K), (0, Np - N)))

    # Generous scoped-VMEM limit so larger tiles keep full double-buffering.
    isz = x2d.dtype.itemsize
    est = 2 * (tm * tk + tk * tn) * isz + tm * tn * 4 + 2 * tm * tn * isz
    vmem_limit = int(min(64 * 2**20, max(48 * 2**20, 2 * est)))

    out = pl.pallas_call(
        _matmul_kernel,
        out_shape=jax.ShapeDtypeStruct((Mp, Np), x2d.dtype),
        grid_spec=pltpu.PrefetchScalarGridSpec(
            num_scalar_prefetch=0,
            grid=(Mp // tm, Np // tn, Kp // tk),
            in_specs=[
                pl.BlockSpec((tm, tk), lambda i, j, k: (i, k)),
                pl.BlockSpec((tk, tn), lambda i, j, k: (k, j)),
            ],
            out_specs=pl.BlockSpec((tm, tn), lambda i, j, k: (i, j)),
            scratch_shapes=[pltpu.VMEM((tm, tn), jnp.float32)],
        ),
        compiler_params=pltpu.CompilerParams(
            dimension_semantics=("parallel", "parallel", "arbitrary"),
            vmem_limit_bytes=vmem_limit,
        ),
    )(xp, wp)

    if (Mp, Np) != (M, N):
        out = out[:M, :N]
    return out


# ------------------------ flash attention (GQA) kernel ------------------------

def _flash_attn_kernel(q_ref, k_ref, v_ref, o_ref, m_ref, l_ref, acc_ref, *,
                       scale, t_actual, need_mask):
    # grid = (B, Hkv, S//tq, n_kv_tiles); the KV-tile axis is last ("arbitrary").
    kv_i = pl.program_id(3)

    @pl.when(kv_i == 0)
    def _():
        m_ref[...] = jnp.full_like(m_ref, _NEG_BIG)
        l_ref[...] = jnp.zeros_like(l_ref)
        acc_ref[...] = jnp.zeros_like(acc_ref)

    sq, dh = acc_ref.shape
    tkv = k_ref.shape[2]

    # Fold 1/sqrt(Dh) into Q (sq*Dh mults) instead of the (sq, tkv) scores.
    q = q_ref[...].reshape(sq, dh) * scale          # (n_rep*tq, Dh) bf16
    k = k_ref[...].reshape(tkv, dh)
    v = v_ref[...].reshape(tkv, dh)

    # QK^T via dot_general contracting the last axes (no explicit K transpose).
    s = jax.lax.dot_general(
        q, k, (((1,), (1,)), ((), ())),
        preferred_element_type=jnp.float32)          # (sq, tkv) f32

    if need_mask:
        # Only the final KV tile can contain padded columns; a finite fill
        # keeps the online-softmax rescale NaN-free.
        col = kv_i * tkv + jax.lax.broadcasted_iota(jnp.int32, s.shape, 1)
        s = jnp.where(col < t_actual, s, _NEG_BIG)

    m_prev = m_ref[...]
    m_new = jnp.maximum(m_prev, jnp.max(s, axis=-1, keepdims=True))
    alpha = jnp.exp(m_prev - m_new)
    p = jnp.exp(s - m_new)
    l_ref[...] = alpha * l_ref[...] + jnp.sum(p, axis=-1, keepdims=True)
    acc_ref[...] = alpha * acc_ref[...] + jnp.dot(
        p.astype(v.dtype), v, preferred_element_type=jnp.float32)
    m_ref[...] = m_new

    @pl.when(kv_i == pl.num_programs(3) - 1)
    def _():
        out = acc_ref[...] * pl.reciprocal(l_ref[...], approx=True)
        o_ref[...] = out.reshape(o_ref.shape).astype(o_ref.dtype)


def _kv_block_spec(block_shape, index_map, deep_buffer):
    # Decode is pure KV bandwidth: deeper multibuffering hides the DMA behind
    # the tiny per-tile compute.  Falls back to the default double buffer if
    # this jax version has no pipeline_mode / Buffered.
    if deep_buffer and hasattr(pl, "Buffered"):
        try:
            return pl.BlockSpec(block_shape, index_map, pipeline_mode=pl.Buffered(3))
        except TypeError:
            pass
    return pl.BlockSpec(block_shape, index_map)


def flash_attention_pallas(xq, cache_k, cache_v, t_actual, n_rep, *, tq=None, tkv=1024):
    """
    xq:      (B, Hq, S, Dh)            current-step queries (head-major)
    cache_k: (Bmax, Hkv, Tmax, Dh)     full KV cache, head-major
    cache_v: (Bmax, Hkv, Tmax, Dh)     (only the first t_actual positions are
                                        attended; tail is masked)
    returns  (B, Hq, S, Dh)

    GQA: the Q/O block packs all n_rep query heads of one KV group, so each
    K/V tile is DMA'd once per group.  The kernel never copies or transposes
    the cache; it only walks ceil(t_actual / tkv) tiles of it.
    """
    B, Hq, S, Dh = xq.shape
    Bmax, Hkv, Tmax, _ = cache_k.shape
    assert Hq == n_rep * Hkv
    scale = 1.0 / math.sqrt(Dh)

    # Query tile: keep sq_blk = n_rep*tq around 512-1024 so prefill stays
    # MXU-bound while the f32 score tile (sq_blk x tkv x 4B) stays ~<=4 MiB.
    if tq is None:
        tq = max(128, min(512, 1024 // max(1, n_rep)))
    tq = min(tq, _round_up(S, 16))
    S_pad = _round_up(S, tq)
    if S_pad != S:
        xq = jnp.pad(xq, ((0, 0), (0, 0), (0, S_pad - S), (0, 0)))

    # KV tile must tile the cache's Tmax exactly (no OOB tile reads).
    tkv = min(tkv, Tmax)
    if Tmax % tkv:
        tkv = math.gcd(tkv, Tmax)
    n_kv = (t_actual + tkv - 1) // tkv       # only walk the live part of the cache
    need_mask = (n_kv * tkv != t_actual)
    sq_blk = n_rep * tq

    # Decode regime: trivial per-tile compute -> deeper K/V multibuffering.
    deep_buffer = (sq_blk <= 64) and (n_kv >= 2)

    kernel = functools.partial(
        _flash_attn_kernel, scale=scale, t_actual=t_actual, need_mask=need_mask)

    # TODO(synk): on v7x decode (B*Hkv*(S//tq) < 2) split the KV axis across
    # the two TensorCores flash-decode style (partial m/l/acc + tiny combine).
    # TODO(synk): on v6e, pack 2 KV heads per grid step (K/V block
    # (1, 2, tkv, Dh)) so PV output width = 2*Dh = 256 fills the 256-wide MXU.
    out = pl.pallas_call(
        kernel,
        out_shape=jax.ShapeDtypeStruct((B, Hq, S_pad, Dh), xq.dtype),
        grid_spec=pltpu.PrefetchScalarGridSpec(
            num_scalar_prefetch=0,
            grid=(B, Hkv, S_pad // tq, n_kv),
            in_specs=[
                pl.BlockSpec((1, n_rep, tq, Dh), lambda b, g, i, t: (b, g, i, 0)),
                _kv_block_spec((1, 1, tkv, Dh), lambda b, g, i, t: (b, g, t, 0),
                               deep_buffer),
                _kv_block_spec((1, 1, tkv, Dh), lambda b, g, i, t: (b, g, t, 0),
                               deep_buffer),
            ],
            out_specs=pl.BlockSpec((1, n_rep, tq, Dh),
                                   lambda b, g, i, t: (b, g, i, 0)),
            scratch_shapes=[
                pltpu.VMEM((sq_blk, 1), jnp.float32),   # running max
                pltpu.VMEM((sq_blk, 1), jnp.float32),   # running sum
                pltpu.VMEM((sq_blk, Dh), jnp.float32),  # output accumulator
            ],
        ),
        compiler_params=pltpu.CompilerParams(
            dimension_semantics=("parallel", "parallel", "parallel", "arbitrary"),
            vmem_limit_bytes=48 * 2**20,
        ),
    )(xq, cache_k, cache_v)

    if S_pad != S:
        out = out[:, :, :S, :]
    return out


# --------------------------------- JAX glue ----------------------------------

def apply_rotary_embeddings(x, cos, sin):
    """x: (B, S, H, Dh); cos/sin: (S, Dh//2) f32.  Interleaved-pair (complex) RoPE.

    TODO(synk): fuse into the QKV epilogue / attention first touch (rotate-half
    with a permuted weight layout or pltpu.roll); under jit this elementwise
    form already fuses with the surrounding reshapes / cache update.
    """
    xf = x.astype(jnp.float32).reshape(*x.shape[:-1], -1, 2)
    xr, xi = xf[..., 0], xf[..., 1]
    c = cos[None, :, None, :]
    s = sin[None, :, None, :]
    out = jnp.stack([xr * c - xi * s, xr * s + xi * c], axis=-1)
    return out.reshape(x.shape).astype(x.dtype)


def precompute_freqs_complex(head_dim, positions, theta=10000.0):
    inv_freq = 1.0 / (theta ** (jnp.arange(0, head_dim, 2, dtype=jnp.float32) / head_dim))
    freqs = jnp.outer(positions.astype(jnp.float32), inv_freq)  # (S, Dh//2)
    return jax.lax.complex(jnp.cos(freqs), jnp.sin(freqs))      # complex64


class SelfAttentionPallas:
    def __init__(self, key, dim, n_heads, n_kv_heads, max_batch_size, max_seq_len,
                 dtype=jnp.bfloat16):
        self.n_kv_heads = n_kv_heads
        self.n_heads_q = n_heads
        self.n_rep = n_heads // n_kv_heads
        self.head_dim = dim // n_heads
        self.dim = dim
        self.dtype = dtype
        self.max_batch_size = max_batch_size
        self.max_seq_len = max_seq_len

        k1, k2, k3, k4 = jax.random.split(key, 4)
        s = 0.1
        # Stored pre-transposed: (in_features, out_features) so y = x @ W.
        self.wq = (s * jax.random.normal(k1, (dim, n_heads * self.head_dim), jnp.float32)).astype(dtype)
        self.wk = (s * jax.random.normal(k2, (dim, n_kv_heads * self.head_dim), jnp.float32)).astype(dtype)
        self.wv = (s * jax.random.normal(k3, (dim, n_kv_heads * self.head_dim), jnp.float32)).astype(dtype)
        self.wo = (s * jax.random.normal(k4, (n_heads * self.head_dim, dim), jnp.float32)).astype(dtype)
        # Fused QKV weight: one GEMM for all three projections.
        self.wqkv = jnp.concatenate([self.wq, self.wk, self.wv], axis=1)

        # Head-major KV cache (B, Hkv, Tmax, Dh): the attention kernel reads it
        # in place, so the cache never takes a transpose / slice round trip.
        self.cache_k = jnp.zeros((max_batch_size, n_kv_heads, max_seq_len, self.head_dim), dtype)
        self.cache_v = jnp.zeros((max_batch_size, n_kv_heads, max_seq_len, self.head_dim), dtype)

    def forward(self, x, start_pos, freqs_complex, cache_k, cache_v):
        """Functional forward: returns (y, new_cache_k, new_cache_v).

        Run under jax.jit with static start_pos and donated cache buffers so
        the KV-cache update is performed in place (no full-cache copy).
        """
        B, S, _ = x.shape
        Dh, Hq, Hkv = self.head_dim, self.n_heads_q, self.n_kv_heads
        in_dtype = x.dtype

        cos = jnp.real(freqs_complex).astype(jnp.float32)
        sin = jnp.imag(freqs_complex).astype(jnp.float32)

        x2d = x.astype(self.dtype).reshape(B * S, self.dim)

        # Fused QKV projection (single tiled GEMM).
        qkv = linear_pallas(x2d, self.wqkv)                 # (B*S, (Hq+2*Hkv)*Dh)
        q_sz, kv_sz = Hq * Dh, Hkv * Dh
        xq = qkv[:, :q_sz].reshape(B, S, Hq, Dh)
        xk = qkv[:, q_sz:q_sz + kv_sz].reshape(B, S, Hkv, Dh)
        xv = qkv[:, q_sz + kv_sz:].reshape(B, S, Hkv, Dh)

        xq = apply_rotary_embeddings(xq, cos, sin)
        xk = apply_rotary_embeddings(xk, cos, sin)

        # Only the *new* S tokens are transposed to head-major; the cache stays
        # put.  Under jit + donation the dynamic_update_slice is in place.
        # TODO(synk): replace with a Pallas scatter kernel using
        # input_output_aliases for fully explicit in-place aliasing.
        xk_hm = jnp.transpose(xk, (0, 2, 1, 3))             # (B, Hkv, S, Dh)
        xv_hm = jnp.transpose(xv, (0, 2, 1, 3))
        cache_k = jax.lax.dynamic_update_slice(cache_k, xk_hm, (0, 0, start_pos, 0))
        cache_v = jax.lax.dynamic_update_slice(cache_v, xv_hm, (0, 0, start_pos, 0))

        T = start_pos + S
        xq_hm = jnp.transpose(xq, (0, 2, 1, 3))             # (B, Hq, S, Dh), new tokens only
        out = flash_attention_pallas(xq_hm, cache_k, cache_v, T, self.n_rep)
        out2d = jnp.transpose(out, (0, 2, 1, 3)).reshape(B * S, Hq * Dh)

        y = linear_pallas(out2d, self.wo)
        return y.reshape(B, S, self.dim).astype(in_dtype), cache_k, cache_v


# ----------------------------- pure-JAX reference -----------------------------

def reference_forward(mod, x, start_pos, freqs_complex):
    """Mirror of the PyTorch module (torch-style layouts, fresh zero caches)."""
    B, S, _ = x.shape
    Dh, Hq, Hkv, n_rep = mod.head_dim, mod.n_heads_q, mod.n_kv_heads, mod.n_rep
    dt = mod.dtype
    cos = jnp.real(freqs_complex).astype(jnp.float32)
    sin = jnp.imag(freqs_complex).astype(jnp.float32)

    cache_k = jnp.zeros((mod.max_batch_size, mod.max_seq_len, Hkv, Dh), dt)
    cache_v = jnp.zeros((mod.max_batch_size, mod.max_seq_len, Hkv, Dh), dt)

    x2d = x.astype(dt).reshape(B * S, mod.dim)
    xq = jnp.dot(x2d, mod.wq, preferred_element_type=jnp.float32).astype(dt).reshape(B, S, Hq, Dh)
    xk = jnp.dot(x2d, mod.wk, preferred_element_type=jnp.float32).astype(dt).reshape(B, S, Hkv, Dh)
    xv = jnp.dot(x2d, mod.wv, preferred_element_type=jnp.float32).astype(dt).reshape(B, S, Hkv, Dh)
    xq = apply_rotary_embeddings(xq, cos, sin)
    xk = apply_rotary_embeddings(xk, cos, sin)
    cache_k = jax.lax.dynamic_update_slice(cache_k, xk, (0, start_pos, 0, 0))
    cache_v = jax.lax.dynamic_update_slice(cache_v, xv, (0, start_pos, 0, 0))
    T = start_pos + S
    keys = jnp.repeat(cache_k[:B, :T], n_rep, axis=2)
    values = jnp.repeat(cache_v[:B, :T], n_rep, axis=2)
    xq = jnp.transpose(xq, (0, 2, 1, 3))
    keys = jnp.transpose(keys, (0, 2, 1, 3))
    values = jnp.transpose(values, (0, 2, 1, 3))
    scores = jnp.einsum("bhsd,bhtd->bhst", xq.astype(jnp.float32),
                        keys.astype(jnp.float32)) / math.sqrt(Dh)
    scores = jax.nn.softmax(scores, axis=-1).astype(dt)
    out = jnp.einsum("bhst,bhtd->bhsd", scores.astype(jnp.float32),
                     values.astype(jnp.float32)).astype(dt)
    out = jnp.transpose(out, (0, 2, 1, 3)).reshape(B * S, Hq * Dh)
    y = jnp.dot(out, mod.wo, preferred_element_type=jnp.float32).astype(dt)
    return y.reshape(B, S, mod.dim).astype(x.dtype)


# ------------------------------------ main ------------------------------------

if __name__ == "__main__":
    warnings.filterwarnings("ignore", message=".*onated buffers.*")

    # Small ModelArgs-consistent shapes.
    dim = 32
    n_heads = 4
    n_kv_heads = 2
    head_dim = dim // n_heads
    max_batch_size = 2
    max_seq_len = 16

    batch = 2
    seq_len = 8
    start_pos = 4

    key = jax.random.PRNGKey(0)
    kparams, kx = jax.random.split(key)

    mod = SelfAttentionPallas(kparams, dim, n_heads, n_kv_heads,
                              max_batch_size, max_seq_len)

    x = jax.random.normal(kx, (batch, seq_len, dim), jnp.float32)
    positions = jnp.arange(start_pos, start_pos + seq_len)
    freqs_complex = precompute_freqs_complex(head_dim, positions)

    # Functional forward under jit with donated caches -> in-place KV update.
    fwd = jax.jit(mod.forward, static_argnums=(1,), donate_argnums=(3, 4))
    out, new_k, new_v = fwd(x, start_pos, freqs_complex, mod.cache_k, mod.cache_v)
    out = jax.block_until_ready(out)
    mod.cache_k, mod.cache_v = new_k, new_v

    ref = reference_forward(mod, x, start_pos, freqs_complex)
    assert out.shape == (batch, seq_len, dim)
    assert jnp.allclose(out.astype(jnp.float32), ref.astype(jnp.float32),
                        atol=2e-2, rtol=2e-2), "mismatch vs reference"

    print("KERNEL_OK")
</pallas_src>

<mosaic_0001>
module attributes {stable_mosaic.version = 11 : i64} {
  func.func @_matmul_kernel(%arg0: i32, %arg1: i32, %arg2: i32, %arg3: memref<16x128xbf16, #tpu.memory_space<vmem>>, %arg4: memref<128x128xbf16, #tpu.memory_space<vmem>>, %arg5: memref<16x128xbf16, #tpu.memory_space<vmem>>, %arg6: memref<16x128xf32, #tpu.memory_space<vmem>>) attributes {dimension_semantics = [#tpu.dimension_semantics<parallel>, #tpu.dimension_semantics<parallel>, #tpu.dimension_semantics<arbitrary>], iteration_bounds = array<i64: 1, 1, 1>, scalar_prefetch = 0 : i64, scratch_operands = 1 : i64, tpu.core_type = #tpu.core_type<tc>, window_params = [{transform_indices = @transform_0, window_bounds = array<i64: 16, 128>}, {transform_indices = @transform_1, window_bounds = array<i64: 128, 128>}, {transform_indices = @transform_2, window_bounds = array<i64: 16, 128>}]} {
    %c0_i32 = arith.constant 0 : i32
    %0 = arith.cmpi eq, %arg2, %c0_i32 : i32
    %1 = arith.extui %0 : i1 to i32
    %c0_i32_0 = arith.constant 0 : i32
    %2 = arith.cmpi ne, %1, %c0_i32_0 : i32
    scf.if %2 {
      %cst_10 = arith.constant 0.000000e+00 : f32
      %12 = vector.broadcast %cst_10 : f32 to vector<16x128xf32>
      %c0_11 = arith.constant 0 : index
      %c0_12 = arith.constant 0 : index
      %13 = vector.load %arg6[%c0_11, %c0_12] : memref<16x128xf32, #tpu.memory_space<vmem>>, vector<16x128xf32>
      tpu.vector_store %arg6[%c0_11, %c0_12], %12 {strides = array<i32>} : memref<16x128xf32, #tpu.memory_space<vmem>>, vector<16x128xf32>,
    } else {
    }
    %c0 = arith.constant 0 : index
    %c0_1 = arith.constant 0 : index
    %3 = vector.load %arg6[%c0, %c0_1] : memref<16x128xf32, #tpu.memory_space<vmem>>, vector<16x128xf32>
    %c0_2 = arith.constant 0 : index
    %c0_3 = arith.constant 0 : index
    %4 = vector.load %arg3[%c0_2, %c0_3] : memref<16x128xbf16, #tpu.memory_space<vmem>>, vector<16x128xbf16>
    %c0_4 = arith.constant 0 : index
    %c0_5 = arith.constant 0 : index
    %5 = vector.load %arg4[%c0_4, %c0_5] : memref<128x128xbf16, #tpu.memory_space<vmem>>, vector<128x128xbf16>
    %cst = arith.constant dense<0.000000e+00> : vector<16x128xf32>
    %6 = tpu.matmul %4, %5, %cst {dimension_numbers = #tpu.dot_dimension_numbers<[1], [0], [0], [1], [0, 0, 1, 1], [], []>} : vector<16x128xbf16>, vector<128x128xbf16>, vector<16x128xf32> -> vector<16x128xf32>
    %7 = arith.addf %3, %6 : vector<16x128xf32>
    %c0_6 = arith.constant 0 : index
    %c0_7 = arith.constant 0 : index
    %8 = vector.load %arg6[%c0_6, %c0_7] : memref<16x128xf32, #tpu.memory_space<vmem>>, vector<16x128xf32>
    tpu.vector_store %arg6[%c0_6, %c0_7], %7 {strides = array<i32>} : memref<16x128xf32, #tpu.memory_space<vmem>>, vector<16x128xf32>,
    %c0_i32_8 = arith.constant 0 : i32
    %9 = arith.cmpi eq, %arg2, %c0_i32_8 : i32
    %10 = arith.extui %9 : i1 to i32
    %c0_i32_9 = arith.constant 0 : i32
    %11 = arith.cmpi ne, %10, %c0_i32_9 : i32
    scf.if %11 {
      %c0_10 = arith.constant 0 : index
      %c0_11 = arith.constant 0 : index
      %12 = vector.load %arg6[%c0_10, %c0_11] : memref<16x128xf32, #tpu.memory_space<vmem>>, vector<16x128xf32>
      %13 = arith.truncf %12 : vector<16x128xf32> to vector<16x128xbf16>
      %c0_12 = arith.constant 0 : index
      %c0_13 = arith.constant 0 : index
      %14 = vector.load %arg5[%c0_12, %c0_13] : memref<16x128xbf16, #tpu.memory_space<vmem>>, vector<16x128xbf16>
      tpu.vector_store %arg5[%c0_12, %c0_13], %13 {strides = array<i32>} : memref<16x128xbf16, #tpu.memory_space<vmem>>, vector<16x128xbf16>,
    } else {
    }
    return
  }
  func.func @transform_0(%arg0: i32, %arg1: i32, %arg2: i32) -> (i32, i32) {
    %c0_i32 = arith.constant 0 : i32
    return %arg0, %arg2 : i32, i32
  }
  func.func @transform_1(%arg0: i32, %arg1: i32, %arg2: i32) -> (i32, i32) {
    %c0_i32 = arith.constant 0 : i32
    return %arg2, %arg1 : i32, i32
  }
  func.func @transform_2(%arg0: i32, %arg1: i32, %arg2: i32) -> (i32, i32) {
    %c0_i32 = arith.constant 0 : i32
    return %arg0, %arg1 : i32, i32
  }
}

module attributes {stable_mosaic.version = 11 : i64} {
  func.func @_flash_attn_kernel(%arg0: i32, %arg1: i32, %arg2: i32, %arg3: i32, %arg4: memref<1x2x16x8xbf16, #tpu.memory_space<vmem>>, %arg5: memref<1x1x16x8xbf16, #tpu.memory_space<vmem>>, %arg6: memref<1x1x16x8xbf16, #tpu.memory_space<vmem>>, %arg7: memref<1x2x16x8xbf16, #tpu.memory_space<vmem>>, %arg8: memref<32x1xf32, #tpu.memory_space<vmem>>, %arg9: memref<32x1xf32, #tpu.memory_space<vmem>>, %arg10: memref<32x8xf32, #tpu.memory_space<vmem>>) attributes {dimension_semantics = [#tpu.dimension_semantics<parallel>, #tpu.dimension_semantics<parallel>, #tpu.dimension_semantics<parallel>, #tpu.dimension_semantics<arbitrary>], iteration_bounds = array<i64: 2, 2, 1, 1>, scalar_prefetch = 0 : i64, scratch_operands = 3 : i64, tpu.core_type = #tpu.core_type<tc>, window_params = [{transform_indices = @transform_0, window_bounds = array<i64: 1, 2, 16, 8>}, {transform_indices = @transform_1, window_bounds = array<i64: 1, 1, 16, 8>}, {transform_indices = @transform_2, window_bounds = array<i64: 1, 1, 16, 8>}, {transform_indices = @transform_3, window_bounds = array<i64: 1, 2, 16, 8>}]} {
    %c0_i32 = arith.constant 0 : i32
    %0 = arith.cmpi eq, %arg3, %c0_i32 : i32
    %1 = arith.extui %0 : i1 to i32
    %c0_i32_0 = arith.constant 0 : i32
    %2 = arith.cmpi ne, %1, %c0_i32_0 : i32
    scf.if %2 {
      %cst_31 = arith.constant -1.000000e+30 : f32
      %46 = vector.broadcast %cst_31 : f32 to vector<32x1xf32>
      %c0_32 = arith.constant 0 : index
      %c0_33 = arith.constant 0 : index
      %47 = vector.load %arg8[%c0_32, %c0_33] : memref<32x1xf32, #tpu.memory_space<vmem>>, vector<32x1xf32>
      tpu.vector_store %arg8[%c0_32, %c0_33], %46 {strides = array<i32>} : memref<32x1xf32, #tpu.memory_space<vmem>>, vector<32x1xf32>,
      %cst_34 = arith.constant 0.000000e+00 : f32
      %48 = vector.broadcast %cst_34 : f32 to vector<32x1xf32>
      %c0_35 = arith.constant 0 : index
      %c0_36 = arith.constant 0 : index
      %49 = vector.load %arg9[%c0_35, %c0_36] : memref<32x1xf32, #tpu.memory_space<vmem>>, vector<32x1xf32>
      tpu.vector_store %arg9[%c0_35, %c0_36], %48 {strides = array<i32>} : memref<32x1xf32, #tpu.memory_space<vmem>>, vector<32x1xf32>,
      %cst_37 = arith.constant 0.000000e+00 : f32
      %50 = vector.broadcast %cst_37 : f32 to vector<32x8xf32>
      %c0_38 = arith.constant 0 : index
      %c0_39 = arith.constant 0 : index
      %51 = vector.load %arg10[%c0_38, %c0_39] : memref<32x8xf32, #tpu.memory_space<vmem>>, vector<32x8xf32>
      tpu.vector_store %arg10[%c0_38, %c0_39], %50 {strides = array<i32>} : memref<32x8xf32, #tpu.memory_space<vmem>>, vector<32x8xf32>,
    } else {
    }
    %c0 = arith.constant 0 : index
    %c0_1 = arith.constant 0 : index
    %c0_2 = arith.constant 0 : index
    %c0_3 = arith.constant 0 : index
    %3 = vector.load %arg4[%c0, %c0_1, %c0_2, %c0_3] : memref<1x2x16x8xbf16, #tpu.memory_space<vmem>>, vector<1x2x16x8xbf16>
    %4 = vector.shape_cast %3 : vector<1x2x16x8xbf16> to vector<32x8xbf16>
    %cst = arith.constant 3.535160e-01 : bf16
    %5 = vector.broadcast %cst : bf16 to vector<32x8xbf16>
    %6 = arith.mulf %4, %5 : vector<32x8xbf16>
    %c0_4 = arith.constant 0 : index
    %c0_5 = arith.constant 0 : index
    %c0_6 = arith.constant 0 : index
    %c0_7 = arith.constant 0 : index
    %7 = vector.load %arg5[%c0_4, %c0_5, %c0_6, %c0_7] : memref<1x1x16x8xbf16, #tpu.memory_space<vmem>>, vector<1x1x16x8xbf16>
    %8 = vector.shape_cast %7 : vector<1x1x16x8xbf16> to vector<16x8xbf16>
    %c0_8 = arith.constant 0 : index
    %c0_9 = arith.constant 0 : index
    %c0_10 = arith.constant 0 : index
    %c0_11 = arith.constant 0 : index
    %9 = vector.load %arg6[%c0_8, %c0_9, %c0_10, %c0_11] : memref<1x1x16x8xbf16, #tpu.memory_space<vmem>>, vector<1x1x16x8xbf16>
    %10 = vector.shape_cast %9 : vector<1x1x16x8xbf16> to vector<16x8xbf16>
    %cst_12 = arith.constant dense<0.000000e+00> : vector<32x16xf32>
    %11 = tpu.matmul %6, %8, %cst_12 {dimension_numbers = #tpu.dot_dimension_numbers<[1], [1], [0], [0], [0, 0, 1, 0], [], []>} : vector<32x8xbf16>, vector<16x8xbf16>, vector<32x16xf32> -> vector<32x16xf32>
    %c16_i32 = arith.constant 16 : i32
    %12 = arith.muli %arg3, %c16_i32 : i32
    %13 = tpu.iota {dimensions = array<i32: 1>} : vector<32x16xi32>
    %14 = vector.broadcast %12 : i32 to vector<32x16xi32>
    %15 = arith.addi %14, %13 : vector<32x16xi32>
    %c12_i32 = arith.constant 12 : i32
    %16 = vector.broadcast %c12_i32 : i32 to vector<32x16xi32>
    %17 = arith.cmpi slt, %15, %16 : vector<32x16xi32>
    %cst_13 = arith.constant -1.000000e+30 : f32
    %18 = vector.broadcast %cst_13 : f32 to vector<32x16xf32>
    %19 = arith.select %17, %11, %18 : vector<32x16xi1>, vector<32x16xf32>
    %c0_14 = arith.constant 0 : index
    %c0_15 = arith.constant 0 : index
    %20 = vector.load %arg8[%c0_14, %c0_15] : memref<32x1xf32, #tpu.memory_space<vmem>>, vector<32x1xf32>
    %cst_16 = arith.constant dense<0xFF800000> : vector<32xf32>
    %21 = vector.multi_reduction <maximumf>, %19, %cst_16 [1] : vector<32x16xf32> to vector<32xf32>
    %22 = vector.shape_cast %21 : vector<32xf32> to vector<32x1xf32>
    %23 = arith.maximumf %20, %22 : vector<32x1xf32>
    %24 = arith.subf %20, %23 : vector<32x1xf32>
    %25 = math.exp %24 : vector<32x1xf32>
    %26 = vector.broadcast %23 : vector<32x1xf32> to vector<32x16xf32>
    %27 = arith.subf %19, %26 : vector<32x16xf32>
    %28 = math.exp %27 : vector<32x16xf32>
    %c0_17 = arith.constant 0 : index
    %c0_18 = arith.constant 0 : index
    %29 = vector.load %arg9[%c0_17, %c0_18] : memref<32x1xf32, #tpu.memory_space<vmem>>, vector<32x1xf32>
    %30 = arith.mulf %25, %29 : vector<32x1xf32>
    %cst_19 = arith.constant dense<0.000000e+00> : vector<32xf32>
    %31 = vector.multi_reduction <add>, %28, %cst_19 [1] : vector<32x16xf32> to vector<32xf32>
    %32 = vector.shape_cast %31 : vector<32xf32> to vector<32x1xf32>
    %33 = arith.addf %30, %32 : vector<32x1xf32>
    %c0_20 = arith.constant 0 : index
    %c0_21 = arith.constant 0 : index
    %34 = vector.load %arg9[%c0_20, %c0_21] : memref<32x1xf32, #tpu.memory_space<vmem>>, vector<32x1xf32>
    tpu.vector_store %arg9[%c0_20, %c0_21], %33 {strides = array<i32>} : memref<32x1xf32, #tpu.memory_space<vmem>>, vector<32x1xf32>,
    %c0_22 = arith.constant 0 : index
    %c0_23 = arith.constant 0 : index
    %35 = vector.load %arg10[%c0_22, %c0_23] : memref<32x8xf32, #tpu.memory_space<vmem>>, vector<32x8xf32>
    %36 = vector.broadcast %25 : vector<32x1xf32> to vector<32x8xf32>
    %37 = arith.mulf %36, %35 : vector<32x8xf32>
    %38 = arith.truncf %28 : vector<32x16xf32> to vector<32x16xbf16>
    %cst_24 = arith.constant dense<0.000000e+00> : vector<32x8xf32>
    %39 = tpu.matmul %38, %10, %cst_24 {dimension_numbers = #tpu.dot_dimension_numbers<[1], [0], [0], [1], [0, 0, 1, 1], [], []>} : vector<32x16xbf16>, vector<16x8xbf16>, vector<32x8xf32> -> vector<32x8xf32>
    %40 = arith.addf %37, %39 : vector<32x8xf32>
    %c0_25 = arith.constant 0 : index
    %c0_26 = arith.constant 0 : index
    %41 = vector.load %arg10[%c0_25, %c0_26] : memref<32x8xf32, #tpu.memory_space<vmem>>, vector<32x8xf32>
    tpu.vector_store %arg10[%c0_25, %c0_26], %40 {strides = array<i32>} : memref<32x8xf32, #tpu.memory_space<vmem>>, vector<32x8xf32>,
    %c0_27 = arith.constant 0 : index
    %c0_28 = arith.constant 0 : index
    %42 = vector.load %arg8[%c0_27, %c0_28] : memref<32x1xf32, #tpu.memory_space<vmem>>, vector<32x1xf32>
    tpu.vector_store %arg8[%c0_27, %c0_28], %23 {strides = array<i32>} : memref<32x1xf32, #tpu.memory_space<vmem>>, vector<32x1xf32>,
    %c0_i32_29 = arith.constant 0 : i32
    %43 = arith.cmpi eq, %arg3, %c0_i32_29 : i32
    %44 = arith.extui %43 : i1 to i32
    %c0_i32_30 = arith.constant 0 : i32
    %45 = arith.cmpi ne, %44, %c0_i32_30 : i32
    scf.if %45 {
      %c0_31 = arith.constant 0 : index
      %c0_32 = arith.constant 0 : index
      %46 = vector.load %arg10[%c0_31, %c0_32] : memref<32x8xf32, #tpu.memory_space<vmem>>, vector<32x8xf32>
      %c0_33 = arith.constant 0 : index
      %c0_34 = arith.constant 0 : index
      %47 = vector.load %arg9[%c0_33, %c0_34] : memref<32x1xf32, #tpu.memory_space<vmem>>, vector<32x1xf32>
      %48 = tpu.reciprocal %47 {approx = true} : vector<32x1xf32> -> vector<32x1xf32>
      %49 = vector.broadcast %48 : vector<32x1xf32> to vector<32x8xf32>
      %50 = arith.mulf %46, %49 : vector<32x8xf32>
      %51 = vector.shape_cast %50 : vector<32x8xf32> to vector<1x2x16x8xf32>
      %52 = arith.truncf %51 : vector<1x2x16x8xf32> to vector<1x2x16x8xbf16>
      %c0_35 = arith.constant 0 : index
      %c0_36 = arith.constant 0 : index
      %c0_37 = arith.constant 0 : index
      %c0_38 = arith.constant 0 : index
      %53 = vector.load %arg7[%c0_35, %c0_36, %c0_37, %c0_38] : memref<1x2x16x8xbf16, #tpu.memory_space<vmem>>, vector<1x2x16x8xbf16>
      tpu.vector_store %arg7[%c0_35, %c0_36, %c0_37, %c0_38], %52 {strides = array<i32>} : memref<1x2x16x8xbf16, #tpu.memory_space<vmem>>, vector<1x2x16x8xbf16>,
    } else {
    }
    return
  }
  func.func @transform_0(%arg0: i32, %arg1: i32, %arg2: i32, %arg3: i32) -> (i32, i32, i32, i32) {
    %c0_i32 = arith.constant 0 : i32
    %c0_i32_0 = arith.constant 0 : i32
    return %arg0, %arg1, %arg2, %c0_i32 : i32, i32, i32, i32
  }
  func.func @transform_1(%arg0: i32, %arg1: i32, %arg2: i32, %arg3: i32) -> (i32, i32, i32, i32) {
    %c0_i32 = arith.constant 0 : i32
    %c0_i32_0 = arith.constant 0 : i32
    return %arg0, %arg1, %arg3, %c0_i32 : i32, i32, i32, i32
  }
  func.func @transform_2(%arg0: i32, %arg1: i32, %arg2: i32, %arg3: i32) -> (i32, i32, i32, i32) {
    %c0_i32 = arith.constant 0 : i32
    %c0_i32_0 = arith.constant 0 : i32
    return %arg0, %arg1, %arg3, %c0_i32 : i32, i32, i32, i32
  }
  func.func @transform_3(%arg0: i32, %arg1: i32, %arg2: i32, %arg3: i32) -> (i32, i32, i32, i32) {
    %c0_i32 = arith.constant 0 : i32
    %c0_i32_0 = arith.constant 0 : i32
    return %arg0, %arg1, %arg2, %c0_i32 : i32, i32, i32, i32
  }
}

module attributes {stable_mosaic.version = 11 : i64} {
  func.func @_matmul_kernel(%arg0: i32, %arg1: i32, %arg2: i32, %arg3: memref<16x128xbf16, #tpu.memory_space<vmem>>, %arg4: memref<128x128xbf16, #tpu.memory_space<vmem>>, %arg5: memref<16x128xbf16, #tpu.memory_space<vmem>>, %arg6: memref<16x128xf32, #tpu.memory_space<vmem>>) attributes {dimension_semantics = [#tpu.dimension_semantics<parallel>, #tpu.dimension_semantics<parallel>, #tpu.dimension_semantics<arbitrary>], iteration_bounds = array<i64: 1, 1, 1>, scalar_prefetch = 0 : i64, scratch_operands = 1 : i64, tpu.core_type = #tpu.core_type<tc>, window_params = [{transform_indices = @transform_0, window_bounds = array<i64: 16, 128>}, {transform_indices = @transform_1, window_bounds = array<i64: 128, 128>}, {transform_indices = @transform_2, window_bounds = array<i64: 16, 128>}]} {
    %c0_i32 = arith.constant 0 : i32
    %0 = arith.cmpi eq, %arg2, %c0_i32 : i32
    %1 = arith.extui %0 : i1 to i32
    %c0_i32_0 = arith.constant 0 : i32
    %2 = arith.cmpi ne, %1, %c0_i32_0 : i32
    scf.if %2 {
      %cst_10 = arith.constant 0.000000e+00 : f32
      %12 = vector.broadcast %cst_10 : f32 to vector<16x128xf32>
      %c0_11 = arith.constant 0 : index
      %c0_12 = arith.constant 0 : index
      %13 = vector.load %arg6[%c0_11, %c0_12] : memref<16x128xf32, #tpu.memory_space<vmem>>, vector<16x128xf32>
      tpu.vector_store %arg6[%c0_11, %c0_12], %12 {strides = array<i32>} : memref<16x128xf32, #tpu.memory_space<vmem>>, vector<16x128xf32>,
    } else {
    }
    %c0 = arith.constant 0 : index
    %c0_1 = arith.constant 0 : index
    %3 = vector.load %arg6[%c0, %c0_1] : memref<16x128xf32, #tpu.memory_space<vmem>>, vector<16x128xf32>
    %c0_2 = arith.constant 0 : index
    %c0_3 = arith.constant 0 : index
    %4 = vector.load %arg3[%c0_2, %c0_3] : memref<16x128xbf16, #tpu.memory_space<vmem>>, vector<16x128xbf16>
    %c0_4 = arith.constant 0 : index
    %c0_5 = arith.constant 0 : index
    %5 = vector.load %arg4[%c0_4, %c0_5] : memref<128x128xbf16, #tpu.memory_space<vmem>>, vector<128x128xbf16>
    %cst = arith.constant dense<0.000000e+00> : vector<16x128xf32>
    %6 = tpu.matmul %4, %5, %cst {dimension_numbers = #tpu.dot_dimension_numbers<[1], [0], [0], [1], [0, 0, 1, 1], [], []>} : vector<16x128xbf16>, vector<128x128xbf16>, vector<16x128xf32> -> vector<16x128xf32>
    %7 = arith.addf %3, %6 : vector<16x128xf32>
    %c0_6 = arith.constant 0 : index
    %c0_7 = arith.constant 0 : index
    %8 = vector.load %arg6[%c0_6, %c0_7] : memref<16x128xf32, #tpu.memory_space<vmem>>, vector<16x128xf32>
    tpu.vector_store %arg6[%c0_6, %c0_7], %7 {strides = array<i32>} : memref<16x128xf32, #tpu.memory_space<vmem>>, vector<16x128xf32>,
    %c0_i32_8 = arith.constant 0 : i32
    %9 = arith.cmpi eq, %arg2, %c0_i32_8 : i32
    %10 = arith.extui %9 : i1 to i32
    %c0_i32_9 = arith.constant 0 : i32
    %11 = arith.cmpi ne, %10, %c0_i32_9 : i32
    scf.if %11 {
      %c0_10 = arith.constant 0 : index
      %c0_11 = arith.constant 0 : index
      %12 = vector.load %arg6[%c0_10, %c0_11] : memref<16x128xf32, #tpu.memory_space<vmem>>, vector<16x128xf32>
      %13 = arith.truncf %12 : vector<16x128xf32> to vector<16x128xbf16>
      %c0_12 = arith.constant 0 : index
      %c0_13 = arith.constant 0 : index
      %14 = vector.load %arg5[%c0_12, %c0_13] : memref<16x128xbf16, #tpu.memory_space<vmem>>, vector<16x128xbf16>
      tpu.vector_store %arg5[%c0_12, %c0_13], %13 {strides = array<i32>} : memref<16x128xbf16, #tpu.memory_space<vmem>>, vector<16x128xbf16>,
    } else {
    }
    return
  }
  func.func @transform_0(%arg0: i32, %arg1: i32, %arg2: i32) -> (i32, i32) {
    %c0_i32 = arith.constant 0 : i32
    return %arg0, %arg2 : i32, i32
  }
  func.func @transform_1(%arg0: i32, %arg1: i32, %arg2: i32) -> (i32, i32) {
    %c0_i32 = arith.constant 0 : i32
    return %arg2, %arg1 : i32, i32
  }
  func.func @transform_2(%arg0: i32, %arg1: i32, %arg2: i32) -> (i32, i32) {
    %c0_i32 = arith.constant 0 : i32
    return %arg0, %arg1 : i32, i32
  }
}

</mosaic_0001>

<llo_original>
// kernel: custom-call
$region0: #{custom-call}
  %s0 = inlined_call_operand.hbm [shape: c64[8,4], index: 0, kind: input, shape index: {}]
  %s1 = inlined_call_operand.vmem [shape: f32[8,4], index: 1, kind: output, shape index: {}]
  $region1: #{custom-call} parent=0
    #allocation0 [shape = 's32[1]{0}', space=sflag, size = 0x4, scoped, tag = 'scoped memory for custom-call']
    %2 = vsyncpa [#allocation0], 0
    %s4 = sshll.u32 %s0, 4
    %s5 = int_to_ptr.hbm [resolvable:$true] %s4
    %s6 = sshll.u32 %s1, 4
    %s7 = int_to_ptr.vmem [resolvable:$true] %s6
    %9 = dma.hbm_to_vmem [thread:$0]  %s5, 64, %s7, [#allocation0]
    %11 = dma.done [#allocation0], 64
    %12 = vsyncpa [#allocation0], 1

// kernel: custom-call.1
$region0: #{custom-call.1}
  %s0 = inlined_call_operand.hbm [shape: c64[8,4], index: 0, kind: input, shape index: {}]
  %s1 = inlined_call_operand.vmem [shape: f32[8,4], index: 1, kind: output, shape index: {}]
  %s2 = scalar_lea.hbm %s0, 4
  $region1: #{custom-call.1} parent=0
    #allocation0 [shape = 's32[1]{0}', space=sflag, size = 0x4, scoped, tag = 'scoped memory for custom-call.1']
    %3 = vsyncpa [#allocation0], 0
    %s5 = sshll.u32 %s2, 4
    %s6 = int_to_ptr.hbm [resolvable:$true] %s5
    %s7 = sshll.u32 %s1, 4
    %s8 = int_to_ptr.vmem [resolvable:$true] %s7
    %10 = dma.hbm_to_vmem [thread:$0]  %s6, 64, %s8, [#allocation0]
    %12 = dma.done [#allocation0], 64
    %13 = vsyncpa [#allocation0], 1

// kernel: forward.3
$region0: #{forward.3}
  #allocation0 [shape = 'u32[]', space=smem, size = 0x4, offset = 0x4, fixed_abs, tag = 'smem constant byte address 0x4 - core index']
  #allocation1 [shape = 'u32[72,128]{1,0:T(1,128)}', space=vmem, size = 0x9000, scoped, tag = 'internal scratch']
  #allocation2 [shape = 'f32[16,128]{1,0:T(8,128)}', space=vmem, size = 0x2000, scoped, tag = 'scratch operand']
  %s0 = inlined_call_operand.vmem [shape: bf16[16,128], index: 0, kind: input, shape index: {}]
  %s1 = inlined_call_operand.hbm [shape: bf16[128,128], index: 1, kind: input, shape index: {}]
  %s2 = inlined_call_operand.vmem [shape: bf16[16,128], index: 2, kind: output, shape index: {}]
  %s3 = sld [smem:[#allocation0]]
  $region30: #{forward.3} parent=0
    _
  %s5 = ssub.s32 1, %s3
  %s6 = scalar_select 0, %s5, %s3
  $region1: #{forward.3} parent=0
    #allocation3 [shape = 'u8[32768]{0}', space=vmem, size = 0x8000, scoped, tag = 'input window, operand 1, single buffered']
    #allocation4 [shape = 's32[1]{0}', space=sflag, size = 0x4, scoped, tag = 'scoped memory for forward.3']
    %7 = vsyncpa [#allocation4], 0
    // Predicated region
    $region2: #{forward.3} parent=1 // pred_check
      _
    $region3: #{forward.3} parent=1 // pred_check_branch
      %9 = sbr.rel (0) target = $region5
    $region4: #{forward.3} parent=1 // pred_region
      _
    $region5: #{forward.3} parent=1 // pred_fallthru
      _
    // Predicated region
    $region6: #{forward.3} parent=1 // pred_check
      _
    $region7: #{forward.3} parent=1 // pred_check_branch
      %11 = sbr.rel (0) target = $region9
    $region8: #{forward.3} parent=1 // pred_region
      %13 = vsyncadd [#allocation4], 0
      %s14 = sshll.u32 %s1, 4
      %s15 = int_to_ptr.hbm [resolvable:$true] %s14
      %s16 = sshll.u32 [#allocation3], 4
      %s17 = int_to_ptr.vmem [resolvable:$true] %s16
      %22 = dma.hbm_to_vmem [thread:$0]  %s15, 1024, %s17, [#allocation4], 64, 64, 4
    $region9: #{forward.3} parent=1 // pred_fallthru
      _
    // Predicated region
    $region10: #{forward.3} parent=1 // pred_check
      _
    $region11: #{forward.3} parent=1 // pred_check_branch
      %24 = sbr.rel (0) target = $region13
    $region12: #{forward.3} parent=1 // pred_region
      %26 = dma.done [#allocation4], 1024
    $region13: #{forward.3} parent=1 // pred_fallthru
      _
    %p27 = scmp.eq.s32.totalorder 0, 0
    // Predicated region
    $region14: #{forward.3} parent=1 // pred_check
      %p28 = pneg %p27
    $region15: #{forward.3} parent=1 // pred_check_branch
      %30 = sbr.rel (%p28) target = $region17
    $region16: #{forward.3} parent=1 // pred_region
      %31 = vst [vmem:[#allocation2] sm:$0xff] 0.0
      %32 = vst [vmem:[#allocation2 + $0x8] sm:$0xff] 0.0
    $region17: #{forward.3} parent=1 // pred_fallthru
      _
    %v33 = vld [vmem:[#allocation2] sm:$0xff]
    %v34 = vld [vmem:[#allocation2 + $0x8] sm:$0xff]
    %v35 = vld [vmem:[%s0] sm:$0xf]
    %v36 = vld [vmem:[%s0 + $0x4] sm:$0xf]
    %v37 = vld [vmem:[#allocation3] sm:$0xf]
    %v38 = vld [vmem:[#allocation3 + $0x4] sm:$0xf]
    %v39 = vld [vmem:[#allocation3 + $0x8] sm:$0xf]
    %v40 = vld [vmem:[#allocation3 + $0xc] sm:$0xf]
    %v41 = vld [vmem:[#allocation3 + $0x10] sm:$0xf]
    %v42 = vld [vmem:[#allocation3 + $0x14] sm:$0xf]
    %v43 = vld [vmem:[#allocation3 + $0x18] sm:$0xf]
    %v44 = vld [vmem:[#allocation3 + $0x1c] sm:$0xf]
    %v45 = vld [vmem:[#allocation3 + $0x20] sm:$0xf]
    %v46 = vld [vmem:[#allocation3 + $0x24] sm:$0xf]
    %v47 = vld [vmem:[#allocation3 + $0x28] sm:$0xf]
    %v48 = vld [vmem:[#allocation3 + $0x2c] sm:$0xf]
    %v49 = vld [vmem:[#allocation3 + $0x30] sm:$0xf]
    %v50 = vld [vmem:[#allocation3 + $0x34] sm:$0xf]
    %v51 = vld [vmem:[#allocation3 + $0x38] sm:$0xf]
    %v52 = vld [vmem:[#allocation3 + $0x3c] sm:$0xf]
    %v55 = vunpack.c.l.b16 %v35
    %v56 = vunpack.c.l.b16 %v36
    %v57 = vpack.c.b16 %v56, %v55
    %v75 = vunpack.c.l.b16 %v37
    %v76 = vunpack.c.l.b16 %v38
    %v77 = vunpack.c.l.b16 %v39
    %v78 = vunpack.c.l.b16 %v40
    %v79 = vunpack.c.l.b16 %v41
    %v80 = vunpack.c.l.b16 %v42
    %v81 = vunpack.c.l.b16 %v43
    %v82 = vunpack.c.l.b16 %v44
    %v83 = vunpack.c.l.b16 %v45
    %v84 = vunpack.c.l.b16 %v46
    %v85 = vunpack.c.l.b16 %v47
    %v86 = vunpack.c.l.b16 %v48
    %v87 = vunpack.c.l.b16 %v49
    %v88 = vunpack.c.l.b16 %v50
    %v89 = vunpack.c.l.b16 %v51
    %v90 = vunpack.c.l.b16 %v52
    %v91 = vpack.c.b16 %v76, %v75
    %v92 = vpack.c.b16 %v78, %v77
    %v93 = vpack.c.b16 %v80, %v79
    %v94 = vpack.c.b16 %v82, %v81
    %v95 = vpack.c.b16 %v84, %v83
    %v96 = vpack.c.b16 %v86, %v85
    %v97 = vpack.c.b16 %v88, %v87
    %v98 = vpack.c.b16 %v90, %v89
    %107 = vmatpush.bf16.msra.mxu0 %v98
    %108 = vmatpush.bf16.msra.mxu0 %v97
    %109 = vmatpush.bf16.msra.mxu0 %v96
    %110 = vmatpush.bf16.msra.mxu0 %v95
    %111 = vmatpush.bf16.msra.mxu0 %v94
    %112 = vmatpush.bf16.msra.mxu0 %v93
    %113 = vmatpush.bf16.msra.mxu0 %v92
    %114 = vmatpush.bf16.msra.mxu0 %v91
    %115 = vmatmul.bf16.gmra.mxu0 %v57
    %v116 = vpop.f32.mrf.mxu0
    %v117 = vadd.f32 0.0, %v116
    %v118 = vpop.f32.mrf.mxu0
    %v119 = vadd.f32 0.0, %v118
    %120 = vdwg.mxu0
    %v121 = vadd.f32 %v33, %v117
    %v122 = vadd.f32 %v34, %v119
    %123 = vst [vmem:[#allocation2] sm:$0xff] %v121
    %124 = vst [vmem:[#allocation2 + $0x8] sm:$0xff] %v122
    // Predicated region
    $region18: #{forward.3} parent=1 // pred_check
      %p125 = pneg %p27
    $region19: #{forward.3} parent=1 // pred_check_branch
      %127 = sbr.rel (%p125) target = $region21
    $region20: #{forward.3} parent=1 // pred_region
      %v128 = vld [vmem:[#allocation2] sm:$0xff]
      %v129 = vld [vmem:[#allocation2 + $0x8] sm:$0xff]
      %v130 = vpack.c.bf16 %v128, %v128
      %v131 = vpack.c.bf16 %v129, %v129
      %132 = vst [vmem:[%s2] sm:$0xf] %v130
      %133 = vst [vmem:[%s2 + $0x4] sm:$0xf] %v131
    $region21: #{forward.3} parent=1 // pred_fallthru
      _
    // Predicated region
    $region22: #{forward.3} parent=1 // pred_check
      _
    $region23: #{forward.3} parent=1 // pred_check_branch
      %135 = sbr.rel (0) target = $region25
    $region24: #{forward.3} parent=1 // pred_region
      _
    $region25: #{forward.3} parent=1 // pred_fallthru
      _
    // Predicated region
    $region26: #{forward.3} parent=1 // pred_check
      _
    $region27: #{forward.3} parent=1 // pred_check_branch
      %137 = sbr.rel (0) target = $region29
    $region28: #{forward.3} parent=1 // pred_region
      _
    $region29: #{forward.3} parent=1 // pred_fallthru
      _
    %138 = vsyncpa [#allocation4], 1

// kernel: forward.5
$region0: #{forward.5}
  #allocation0 [shape = 'u32[]', space=smem, size = 0x4, offset = 0x4, fixed_abs, tag = 'smem constant byte address 0x4 - core index']
  #allocation1 [shape = 'u32[72,128]{1,0:T(1,128)}', space=vmem, size = 0x9000, scoped, tag = 'internal scratch']
  #allocation2 [shape = 'f32[16,128]{1,0:T(8,128)}', space=vmem, size = 0x2000, scoped, tag = 'scratch operand']
  %s0 = inlined_call_operand.vmem [shape: bf16[16,128], index: 0, kind: input, shape index: {}]
  %s1 = inlined_call_operand.vmem [shape: bf16[128,128], index: 1, kind: input, shape index: {}]
  %s2 = inlined_call_operand.vmem [shape: bf16[16,128], index: 2, kind: output, shape index: {}]
  %s3 = sld [smem:[#allocation0]]
  $region26: #{forward.5} parent=0
    _
  %s5 = ssub.s32 1, %s3
  %s6 = scalar_select 0, %s5, %s3
  // Predicated region
  $region2: #{forward.5} parent=0 // pred_check
    _
  $region3: #{forward.5} parent=0 // pred_check_branch
    %8 = sbr.rel (0) target = $region5
  $region4: #{forward.5} parent=0 // pred_region
    _
  $region5: #{forward.5} parent=0 // pred_fallthru
    _
  // Predicated region
  $region6: #{forward.5} parent=0 // pred_check
    _
  $region7: #{forward.5} parent=0 // pred_check_branch
    %10 = sbr.rel (0) target = $region9
  $region8: #{forward.5} parent=0 // pred_region
    _
  $region9: #{forward.5} parent=0 // pred_fallthru
    _
  %p11 = scmp.eq.s32.totalorder 0, 0
  // Predicated region
  $region10: #{forward.5} parent=0 // pred_check
    %p12 = pneg %p11
  $region11: #{forward.5} parent=0 // pred_check_branch
    %14 = sbr.rel (%p12) target = $region13
  $region12: #{forward.5} parent=0 // pred_region
    %15 = vst [vmem:[#allocation2] sm:$0xff] 0.0
    %16 = vst [vmem:[#allocation2 + $0x8] sm:$0xff] 0.0
  $region13: #{forward.5} parent=0 // pred_fallthru
    _
  %v17 = vld [vmem:[#allocation2] sm:$0xff]
  %v18 = vld [vmem:[#allocation2 + $0x8] sm:$0xff]
  %v19 = vld [vmem:[%s0] sm:$0xf]
  %v20 = vld [vmem:[%s0 + $0x4] sm:$0xf]
  %v21 = vld [vmem:[%s1] sm:$0xf]
  %v22 = vld [vmem:[%s1 + $0x4] sm:$0xf]
  %v23 = vld [vmem:[%s1 + $0x8] sm:$0xf]
  %v24 = vld [vmem:[%s1 + $0xc] sm:$0xf]
  %v25 = vld [vmem:[%s1 + $0x10] sm:$0xf]
  %v26 = vld [vmem:[%s1 + $0x14] sm:$0xf]
  %v27 = vld [vmem:[%s1 + $0x18] sm:$0xf]
  %v28 = vld [vmem:[%s1 + $0x1c] sm:$0xf]
  %v29 = vld [vmem:[%s1 + $0x20] sm:$0xf]
  %v30 = vld [vmem:[%s1 + $0x24] sm:$0xf]
  %v31 = vld [vmem:[%s1 + $0x28] sm:$0xf]
  %v32 = vld [vmem:[%s1 + $0x2c] sm:$0xf]
  %v33 = vld [vmem:[%s1 + $0x30] sm:$0xf]
  %v34 = vld [vmem:[%s1 + $0x34] sm:$0xf]
  %v35 = vld [vmem:[%s1 + $0x38] sm:$0xf]
  %v36 = vld [vmem:[%s1 + $0x3c] sm:$0xf]
  %v39 = vunpack.c.l.b16 %v19
  %v40 = vunpack.c.l.b16 %v20
  %v41 = vpack.c.b16 %v40, %v39
  %v59 = vunpack.c.l.b16 %v21
  %v60 = vunpack.c.l.b16 %v22
  %v61 = vunpack.c.l.b16 %v23
  %v62 = vunpack.c.l.b16 %v24
  %v63 = vunpack.c.l.b16 %v25
  %v64 = vunpack.c.l.b16 %v26
  %v65 = vunpack.c.l.b16 %v27
  %v66 = vunpack.c.l.b16 %v28
  %v67 = vunpack.c.l.b16 %v29
  %v68 = vunpack.c.l.b16 %v30
  %v69 = vunpack.c.l.b16 %v31
  %v70 = vunpack.c.l.b16 %v32
  %v71 = vunpack.c.l.b16 %v33
  %v72 = vunpack.c.l.b16 %v34
  %v73 = vunpack.c.l.b16 %v35
  %v74 = vunpack.c.l.b16 %v36
  %v75 = vpack.c.b16 %v60, %v59
  %v76 = vpack.c.b16 %v62, %v61
  %v77 = vpack.c.b16 %v64, %v63
  %v78 = vpack.c.b16 %v66, %v65
  %v79 = vpack.c.b16 %v68, %v67
  %v80 = vpack.c.b16 %v70, %v69
  %v81 = vpack.c.b16 %v72, %v71
  %v82 = vpack.c.b16 %v74, %v73
  %91 = vmatpush.bf16.msra.mxu0 %v82
  %92 = vmatpush.bf16.msra.mxu0 %v81
  %93 = vmatpush.bf16.msra.mxu0 %v80
  %94 = vmatpush.bf16.msra.mxu0 %v79
  %95 = vmatpush.bf16.msra.mxu0 %v78
  %96 = vmatpush.bf16.msra.mxu0 %v77
  %97 = vmatpush.bf16.msra.mxu0 %v76
  %98 = vmatpush.bf16.msra.mxu0 %v75
  %99 = vmatmul.bf16.gmra.mxu0 %v41
  %v100 = vpop.f32.mrf.mxu0
  %v101 = vadd.f32 0.0, %v100
  %v102 = vpop.f32.mrf.mxu0
  %v103 = vadd.f32 0.0, %v102
  %104 = vdwg.mxu0
  %v105 = vadd.f32 %v17, %v101
  %v106 = vadd.f32 %v18, %v103
  %107 = vst [vmem:[#allocation2] sm:$0xff] %v105
  %108 = vst [vmem:[#allocation2 + $0x8] sm:$0xff] %v106
  // Predicated region
  $region14: #{forward.5} parent=0 // pred_check
    %p109 = pneg %p11
  $region15: #{forward.5} parent=0 // pred_check_branch
    %111 = sbr.rel (%p109) target = $region17
  $region16: #{forward.5} parent=0 // pred_region
    %v112 = vld [vmem:[#allocation2] sm:$0xff]
    %v113 = vld [vmem:[#allocation2 + $0x8] sm:$0xff]
    %v114 = vpack.c.bf16 %v112, %v112
    %v115 = vpack.c.bf16 %v113, %v113
    %116 = vst [vmem:[%s2] sm:$0xf] %v114
    %117 = vst [vmem:[%s2 + $0x4] sm:$0xf] %v115
  $region17: #{forward.5} parent=0 // pred_fallthru
    _
  // Predicated region
  $region18: #{forward.5} parent=0 // pred_check
    _
  $region19: #{forward.5} parent=0 // pred_check_branch
    %119 = sbr.rel (0) target = $region21
  $region20: #{forward.5} parent=0 // pred_region
    _
  $region21: #{forward.5} parent=0 // pred_fallthru
    _
  // Predicated region
  $region22: #{forward.5} parent=0 // pred_check
    _
  $region23: #{forward.5} parent=0 // pred_check_branch
    %121 = sbr.rel (0) target = $region25
  $region24: #{forward.5} parent=0 // pred_region
    _
  $region25: #{forward.5} parent=0 // pred_fallthru
    _

// kernel: forward.4
$region0: #{forward.4}
  #allocation0 [shape = 'u32[]', space=smem, size = 0x4, offset = 0x4, fixed_abs, tag = 'smem constant byte address 0x4 - core index']
  #allocation1 [shape = 'u32[72,128]{1,0:T(1,128)}', space=vmem, size = 0x9000, scoped, tag = 'internal scratch']
  #allocation2 [shape = 'f32[32,1]{1,0:T(8,128)}', space=vmem, size = 0x4000, scoped, tag = 'scratch operand']
  #allocation3 [shape = 'f32[32,1]{1,0:T(8,128)}', space=vmem, size = 0x4000, scoped, tag = 'scratch operand']
  #allocation4 [shape = 'f32[32,8]{1,0:T(8,128)}', space=vmem, size = 0x4000, scoped, tag = 'scratch operand']
  %s0 = inlined_call_operand.vmem [shape: bf16[2,4,16,8], index: 0, kind: input, shape index: {}]
  %s1 = inlined_call_operand.vmem [shape: bf16[2,2,16,8], index: 1, kind: input, shape index: {}]
  %s2 = inlined_call_operand.vmem [shape: bf16[2,2,16,8], index: 2, kind: input, shape index: {}]
  %s3 = inlined_call_operand.vmem [shape: bf16[2,4,16,8], index: 3, kind: output, shape index: {}]
  %s4 = sld [smem:[#allocation0]]
  $region53: #{forward.4} parent=0
    _
  %s6 = ssub.s32 1, %s4
  %s7 = scalar_select 0, %s6, %s4
  loop: start=0, step=1, limit=6
  $region2: #{forward.4} parent=0 // loop_pre_header
    _
  $region3: #{forward.4} parent=0 // loop_header
    %s9 = sphi 0, %s13
    %p10 = scmp.ge.s32.totalorder %s9, 6
    %s16 = sphi 0, %s42
    %s17 = sphi 0, %s38
    %s18 = sphi 0, %s34
    %s19 = sphi 0, %s30
    %s20 = sphi 0, %s16
    %s21 = sphi 0, %s17
    %s22 = sphi 0, %s18
    %s23 = sphi 0, %s19
    %s24 = sphi 0, %s20
    %s25 = sphi 0, %s21
    %s26 = sphi 0, %s22
    %s27 = sphi 0, %s23
    %s49 = sphi 0, %s51
    %s52 = sphi 0, %s49
    %s53 = sphi 0, %s52
    %s69 = sphi 0, %s53
    %s79 = sphi 0, %s81
    %s82 = sphi 0, %s79
    %s83 = sphi 0, %s82
    %s99 = sphi 0, %s83
    %s109 = sphi 0, %s111
    %s112 = sphi 0, %s109
    %s113 = sphi 0, %s112
    %s129 = sphi 0, %s113
    %s139 = sphi 0, %s141
    %s142 = sphi 0, %s139
    %s143 = sphi 0, %s142
    %s159 = sphi 0, %s143
  $region4: #{forward.4} parent=0 // loop_header_branch
    %12 = sbr.rel (%p10) target = $region8
  $region5: #{forward.4} parent=0 // loop_body
    %s14 = ssub.s32 %s9, 1
    %s15 = ssub.s32 %s9, 2
    %s28 = sadd.s32 1, %s19
    %p29 = scmp.ge.s32.totalorder %s28, 1
    %s30 = scalar_select %p29, 0, %s28
    %s31 = sadd.s32 1, %s18
    %s32 = scalar_select %p29, %s31, %s18
    %p33 = scmp.ge.s32.totalorder %s32, 1
    %s34 = scalar_select %p33, 0, %s32
    %s35 = sadd.s32 1, %s17
    %s36 = scalar_select %p33, %s35, %s17
    %p37 = scmp.ge.s32.totalorder %s36, 2
    %s38 = scalar_select %p37, 0, %s36
    %s39 = sadd.s32 1, %s16
    %s40 = scalar_select %p37, %s39, %s16
    %p41 = scmp.ge.s32.totalorder %s40, 2
    %s42 = scalar_select %p41, 0, %s40
    %s43 = ssub.s32 %s16, %s42
    %s44 = ssub.s32 %s17, %s38
    %s45 = sor.u32 %s43, %s44
    %s46 = ssub.s32 %s18, %s34
    %s47 = sor.u32 %s45, %s46
    %p48 = scmp.eq.s32.totalorder %s47, 0
    %s50 = sadd.s32 %s49, 1
    %s51 = scalar_select %p48, %s49, %s50
    %p54 = pneg %p48
    %p55 = scmp.eq.s32.totalorder %s9, 3
    %p56 = por %p54, %p55
    %p57 = scmp.ne.s32.totalorder %s49, %s52
    %p58 = scmp.eq.s32.totalorder %s9, 0
    %p59 = por %p57, %p58
    %p60 = scmp.ne.s32.totalorder %s49, %s52
    %p61 = scmp.eq.s32.totalorder %s14, 3
    %p62 = por %p60, %p61
    %p63 = scmp.ne.s32.totalorder %s52, %s53
    %p64 = scmp.eq.s32.totalorder %s14, 0
    %p65 = por %p63, %p64
    %p66 = scmp.ne.s32.totalorder %s52, %s53
    %p67 = scmp.eq.s32.totalorder %s15, 3
    %p68 = por %p66, %p67
    %p70 = scmp.ne.s32.totalorder %s53, %s69
    %p71 = scmp.eq.s32.totalorder %s15, 0
    %p72 = por %p70, %p71
    %s73 = ssub.s32 %s16, %s42
    %s74 = ssub.s32 %s17, %s38
    %s75 = sor.u32 %s73, %s74
    %s76 = ssub.s32 %s19, %s30
    %s77 = sor.u32 %s75, %s76
    %p78 = scmp.eq.s32.totalorder %s77, 0
    %s80 = sadd.s32 %s79, 1
    %s81 = scalar_select %p78, %s79, %s80
    %p84 = pneg %p78
    %p85 = scmp.eq.s32.totalorder %s9, 3
    %p86 = por %p84, %p85
    %p87 = scmp.ne.s32.totalorder %s79, %s82
    %p88 = scmp.eq.s32.totalorder %s9, 0
    %p89 = por %p87, %p88
    %p90 = scmp.ne.s32.totalorder %s79, %s82
    %p91 = scmp.eq.s32.totalorder %s14, 3
    %p92 = por %p90, %p91
    %p93 = scmp.ne.s32.totalorder %s82, %s83
    %p94 = scmp.eq.s32.totalorder %s14, 0
    %p95 = por %p93, %p94
    %p96 = scmp.ne.s32.totalorder %s82, %s83
    %p97 = scmp.eq.s32.totalorder %s15, 3
    %p98 = por %p96, %p97
    %p100 = scmp.ne.s32.totalorder %s83, %s99
    %p101 = scmp.eq.s32.totalorder %s15, 0
    %p102 = por %p100, %p101
    %s103 = ssub.s32 %s16, %s42
    %s104 = ssub.s32 %s17, %s38
    %s105 = sor.u32 %s103, %s104
    %s106 = ssub.s32 %s19, %s30
    %s107 = sor.u32 %s105, %s106
    %p108 = scmp.eq.s32.totalorder %s107, 0
    %s110 = sadd.s32 %s109, 1
    %s111 = scalar_select %p108, %s109, %s110
    %p114 = pneg %p108
    %p115 = scmp.eq.s32.totalorder %s9, 3
    %p116 = por %p114, %p115
    %p117 = scmp.ne.s32.totalorder %s109, %s112
    %p118 = scmp.eq.s32.totalorder %s9, 0
    %p119 = por %p117, %p118
    %p120 = scmp.ne.s32.totalorder %s109, %s112
    %p121 = scmp.eq.s32.totalorder %s14, 3
    %p122 = por %p120, %p121
    %p123 = scmp.ne.s32.totalorder %s112, %s113
    %p124 = scmp.eq.s32.totalorder %s14, 0
    %p125 = por %p123, %p124
    %p126 = scmp.ne.s32.totalorder %s112, %s113
    %p127 = scmp.eq.s32.totalorder %s15, 3
    %p128 = por %p126, %p127
    %p130 = scmp.ne.s32.totalorder %s113, %s129
    %p131 = scmp.eq.s32.totalorder %s15, 0
    %p132 = por %p130, %p131
    %s133 = ssub.s32 %s16, %s42
    %s134 = ssub.s32 %s17, %s38
    %s135 = sor.u32 %s133, %s134
    %s136 = ssub.s32 %s18, %s34
    %s137 = sor.u32 %s135, %s136
    %p138 = scmp.eq.s32.totalorder %s137, 0
    %s140 = sadd.s32 %s139, 1
    %s141 = scalar_select %p138, %s139, %s140
    %p144 = pneg %p138
    %p145 = scmp.eq.s32.totalorder %s9, 3
    %p146 = por %p144, %p145
    %p147 = scmp.ne.s32.totalorder %s139, %s142
    %p148 = scmp.eq.s32.totalorder %s9, 0
    %p149 = por %p147, %p148
    %p150 = scmp.ne.s32.totalorder %s139, %s142
    %p151 = scmp.eq.s32.totalorder %s14, 3
    %p152 = por %p150, %p151
    %p153 = scmp.ne.s32.totalorder %s142, %s143
    %p154 = scmp.eq.s32.totalorder %s14, 0
    %p155 = por %p153, %p154
    %p156 = scmp.ne.s32.totalorder %s142, %s143
    %p157 = scmp.eq.s32.totalorder %s15, 3
    %p158 = por %p156, %p157
    %p160 = scmp.ne.s32.totalorder %s143, %s159
    %p161 = scmp.eq.s32.totalorder %s15, 0
    %p162 = por %p160, %p161
    %p163 = scmp.le.s32.totalorder 1, %s9
    %p164 = scmp.lt.s32.totalorder %s9, 5
    %p165 = pnand %p163, %p164
    %p166 = pneg %p165
    // Predicated region
    $region9: #{forward.4} parent=5 // pred_check
      _
    $region10: #{forward.4} parent=5 // pred_check_branch
      %168 = sbr.rel (%p165) target = $region12
    $region11: #{forward.4} parent=5 // pred_region
      %s169 = ssub.s32 %s9, 1
    $region12: #{forward.4} parent=5 // pred_fallthru
      _
    %p170 = scmp.lt.s32.totalorder %s9, 4
    // Predicated region
    $region13: #{forward.4} parent=5 // pred_check
      %p171 = pneg %p170
    $region14: #{forward.4} parent=5 // pred_check_branch
      %173 = sbr.rel (%p171) target = $region16
    $region15: #{forward.4} parent=5 // pred_region
      // Predicated region
      $region17: #{forward.4} parent=15 // pred_check
        %p174 = pneg %p59
      $region18: #{forward.4} parent=15 // pred_check_branch
        %176 = sbr.rel (%p174) target = $region20
      $region19: #{forward.4} parent=15 // pred_region
        %s177 = smul.u32 2, %s17
        %s178 = smul.u32 2, %s18
        %p179 = scmp.lt.s32.totalorder %s16, 1
        %s180 = scalar_select %p179, %s16, 1
        %p181 = scmp.lt.s32.totalorder %s177, 3
        %s182 = scalar_select %p181, %s177, 3
        %p183 = scmp.lt.s32.totalorder %s178, 1
        %s184 = scalar_select %p183, %s178, 1
        %s185 = smul.addr %s182, 2
        %s186 = sadd.s32 %s184, %s185
        %s187 = smul.addr %s180, 8
        %s188 = sadd.s32 %s186, %s187
        %s189 = smul.addr %s188, 4
        %s190 = scalar_lea.vmem %s0, %s189
        %s191 = smul.u32 2, %s17
        %s192 = smul.u32 2, %s18
      $region20: #{forward.4} parent=15 // pred_fallthru
        _
      // Predicated region
      $region21: #{forward.4} parent=15 // pred_check
        %p193 = pneg %p89
      $region22: #{forward.4} parent=15 // pred_check_branch
        %195 = sbr.rel (%p193) target = $region24
      $region23: #{forward.4} parent=15 // pred_region
        %s196 = smul.u32 2, %s19
        %p197 = scmp.lt.s32.totalorder %s16, 1
        %s198 = scalar_select %p197, %s16, 1
        %p199 = scmp.lt.s32.totalorder %s17, 1
        %s200 = scalar_select %p199, %s17, 1
        %p201 = scmp.lt.s32.totalorder %s196, 1
        %s202 = scalar_select %p201, %s196, 1
        %s203 = smul.addr %s200, 2
        %s204 = sadd.s32 %s202, %s203
        %s205 = smul.addr %s198, 4
        %s206 = sadd.s32 %s204, %s205
        %s207 = smul.addr %s206, 4
        %s208 = scalar_lea.vmem %s1, %s207
        %s209 = smul.u32 2, %s19
      $region24: #{forward.4} parent=15 // pred_fallthru
        _
      // Predicated region
      $region25: #{forward.4} parent=15 // pred_check
        %p210 = pneg %p119
      $region26: #{forward.4} parent=15 // pred_check_branch
        %212 = sbr.rel (%p210) target = $region28
      $region27: #{forward.4} parent=15 // pred_region
        %s213 = smul.u32 2, %s19
        %p214 = scmp.lt.s32.totalorder %s16, 1
        %s215 = scalar_select %p214, %s16, 1
        %p216 = scmp.lt.s32.totalorder %s17, 1
        %s217 = scalar_select %p216, %s17, 1
        %p218 = scmp.lt.s32.totalorder %s213, 1
        %s219 = scalar_select %p218, %s213, 1
        %s220 = smul.addr %s217, 2
        %s221 = sadd.s32 %s219, %s220
        %s222 = smul.addr %s215, 4
        %s223 = sadd.s32 %s221, %s222
        %s224 = smul.addr %s223, 4
        %s225 = scalar_lea.vmem %s2, %s224
        %s226 = smul.u32 2, %s19
      $region28: #{forward.4} parent=15 // pred_fallthru
        _
    $region16: #{forward.4} parent=5 // pred_fallthru
      _
    %p227 = scmp.le.s32.totalorder 1, %s9
    %p228 = scmp.lt.s32.totalorder %s9, 5
    %p229 = pnand %p227, %p228
    %p230 = pneg %p229
    // Predicated region
    $region29: #{forward.4} parent=5 // pred_check
      _
    $region30: #{forward.4} parent=5 // pred_check_branch
      %232 = sbr.rel (%p229) target = $region32
    $region31: #{forward.4} parent=5 // pred_region
      %s233 = ssub.s32 %s9, 1
      %s234 = smul.u32 2, %s21
      %s235 = smul.u32 2, %s22
      %p236 = scmp.lt.s32.totalorder %s20, 1
      %s237 = scalar_select %p236, %s20, 1
      %p238 = scmp.lt.s32.totalorder %s234, 3
      %s239 = scalar_select %p238, %s234, 3
      %p240 = scmp.lt.s32.totalorder %s235, 1
      %s241 = scalar_select %p240, %s235, 1
      %s242 = smul.addr %s239, 2
      %s243 = sadd.s32 %s241, %s242
      %s244 = smul.addr %s237, 8
      %s245 = sadd.s32 %s243, %s244
      %s246 = smul.addr %s245, 4
      %s247 = scalar_lea.vmem %s0, %s246
      %p248 = pneg %p65
      %p249 = pneg %p62
      %s250 = smul.u32 2, %s23
      %p251 = scmp.lt.s32.totalorder %s20, 1
      %s252 = scalar_select %p251, %s20, 1
      %p253 = scmp.lt.s32.totalorder %s21, 1
      %s254 = scalar_select %p253, %s21, 1
      %p255 = scmp.lt.s32.totalorder %s250, 1
      %s256 = scalar_select %p255, %s250, 1
      %s257 = smul.addr %s254, 2
      %s258 = sadd.s32 %s256, %s257
      %s259 = smul.addr %s252, 4
      %s260 = sadd.s32 %s258, %s259
      %s261 = smul.addr %s260, 4
      %s262 = scalar_lea.vmem %s1, %s261
      %p263 = pneg %p95
      %p264 = pneg %p92
      %s265 = smul.u32 2, %s23
      %p266 = scmp.lt.s32.totalorder %s20, 1
      %s267 = scalar_select %p266, %s20, 1
      %p268 = scmp.lt.s32.totalorder %s21, 1
      %s269 = scalar_select %p268, %s21, 1
      %p270 = scmp.lt.s32.totalorder %s265, 1
      %s271 = scalar_select %p270, %s265, 1
      %s272 = smul.addr %s269, 2
      %s273 = sadd.s32 %s271, %s272
      %s274 = smul.addr %s267, 4
      %s275 = sadd.s32 %s273, %s274
      %s276 = smul.addr %s275, 4
      %s277 = scalar_lea.vmem %s2, %s276
      %p278 = pneg %p125
      %p279 = pneg %p122
      %p280 = pneg %p155
      %p281 = pneg %p152
      %s282 = smul.u32 2, %s21
      %s283 = smul.u32 2, %s22
      %p284 = scmp.lt.s32.totalorder %s20, 1
      %s285 = scalar_select %p284, %s20, 1
      %p286 = scmp.lt.s32.totalorder %s282, 3
      %s287 = scalar_select %p286, %s282, 3
      %p288 = scmp.lt.s32.totalorder %s283, 1
      %s289 = scalar_select %p288, %s283, 1
      %s290 = smul.addr %s287, 2
      %s291 = sadd.s32 %s289, %s290
      %s292 = smul.addr %s285, 8
      %s293 = sadd.s32 %s291, %s292
      %s294 = smul.addr %s293, 4
      %s295 = scalar_lea.vmem %s3, %s294
      %s296 = smul.u32 2, %s21
      %s297 = smul.u32 2, %s22
      %p298 = scmp.lt.s32.totalorder %s20, 1
      %s299 = scalar_select %p298, %s20, 1
      %p300 = scmp.lt.s32.totalorder %s296, 3
      %s301 = scalar_select %p300, %s296, 3
      %p302 = scmp.lt.s32.totalorder %s297, 1
      %s303 = scalar_select %p302, %s297, 1
      %s304 = smul.addr %s301, 2
      %s305 = sadd.s32 %s303, %s304
      %s306 = smul.addr %s299, 8
      %s307 = sadd.s32 %s305, %s306
      %s308 = smul.addr %s307, 4
      %s309 = scalar_lea.vmem %s0, %s308
      %s310 = smul.u32 2, %s21
      %s311 = smul.u32 2, %s22
      %s312 = smul.u32 2, %s23
      %p313 = scmp.lt.s32.totalorder %s20, 1
      %s314 = scalar_select %p313, %s20, 1
      %p315 = scmp.lt.s32.totalorder %s21, 1
      %s316 = scalar_select %p315, %s21, 1
      %p317 = scmp.lt.s32.totalorder %s312, 1
      %s318 = scalar_select %p317, %s312, 1
      %s319 = smul.addr %s316, 2
      %s320 = sadd.s32 %s318, %s319
      %s321 = smul.addr %s314, 4
      %s322 = sadd.s32 %s320, %s321
      %s323 = smul.addr %s322, 4
      %s324 = scalar_lea.vmem %s1, %s323
      %s325 = smul.u32 2, %s23
      %s326 = smul.u32 2, %s23
      %p327 = scmp.lt.s32.totalorder %s20, 1
      %s328 = scalar_select %p327, %s20, 1
      %p329 = scmp.lt.s32.totalorder %s21, 1
      %s330 = scalar_select %p329, %s21, 1
      %p331 = scmp.lt.s32.totalorder %s326, 1
      %s332 = scalar_select %p331, %s326, 1
      %s333 = smul.addr %s330, 2
      %s334 = sadd.s32 %s332, %s333
      %s335 = smul.addr %s328, 4
      %s336 = sadd.s32 %s334, %s335
      %s337 = smul.addr %s336, 4
      %s338 = scalar_lea.vmem %s2, %s337
      %s339 = smul.u32 2, %s23
      %s340 = smul.u32 2, %s21
      %s341 = smul.u32 2, %s22
      %p342 = scmp.lt.s32.totalorder %s20, 1
      %s343 = scalar_select %p342, %s20, 1
      %p344 = scmp.lt.s32.totalorder %s340, 3
      %s345 = scalar_select %p344, %s340, 3
      %p346 = scmp.lt.s32.totalorder %s341, 1
      %s347 = scalar_select %p346, %s341, 1
      %s348 = smul.addr %s345, 2
      %s349 = sadd.s32 %s347, %s348
      %s350 = smul.addr %s343, 8
      %s351 = sadd.s32 %s349, %s350
      %s352 = smul.addr %s351, 4
      %s353 = scalar_lea.vmem %s3, %s352
      %s354 = smul.u32 2, %s21
      %s355 = smul.u32 2, %s22
      %p357 = scmp.eq.s32.totalorder %s23, 0
      // Predicated region
      $region33: #{forward.4} parent=31 // pred_check
        %p358 = pneg %p357
      $region34: #{forward.4} parent=31 // pred_check_branch
        %360 = sbr.rel (%p358) target = $region36
      $region35: #{forward.4} parent=31 // pred_region
        %vm361 = vcmask 7168
        %362 = vst.msk [vmem:[#allocation2] sm:$0xff] %vm361, -1e+30
        %363 = vst.msk [vmem:[#allocation2 + $0x8] sm:$0xff] %vm361, -1e+30
        %364 = vst.msk [vmem:[#allocation2 + $0x10] sm:$0xff] %vm361, -1e+30
        %365 = vst.msk [vmem:[#allocation2 + $0x18] sm:$0xff] %vm361, -1e+30
        %366 = vst.msk [vmem:[#allocation3] sm:$0xff] %vm361, 0.0
        %367 = vst.msk [vmem:[#allocation3 + $0x8] sm:$0xff] %vm361, 0.0
        %368 = vst.msk [vmem:[#allocation3 + $0x10] sm:$0xff] %vm361, 0.0
        %369 = vst.msk [vmem:[#allocation3 + $0x18] sm:$0xff] %vm361, 0.0
        %vm370 = vcmask 64512
        %371 = vst.msk [vmem:[#allocation4] sm:$0xff] %vm370, 0.0
        %372 = vst.msk [vmem:[#allocation4 + $0x8] sm:$0xff] %vm370, 0.0
        %373 = vst.msk [vmem:[#allocation4 + $0x10] sm:$0xff] %vm370, 0.0
        %374 = vst.msk [vmem:[#allocation4 + $0x18] sm:$0xff] %vm370, 0.0
      $region36: #{forward.4} parent=31 // pred_fallthru
        _
      %v375 = vld [vmem:[%s309] sm:$0xf]
      %v376 = vld [vmem:[%s309 + $0x4] sm:$0xf]
      %v377 = vld [vmem:[%s309 + $0x8] sm:$0xf]
      %v378 = vld [vmem:[%s309 + $0xc] sm:$0xf]
      %v379 = vunpack.c.l.bf16 %v375
      %v380 = vunpack.c.l.bf16 %v376
      %v381 = vunpack.c.l.bf16 %v377
      %v382 = vunpack.c.l.bf16 %v378
      %v383 = vmul.f32 %v379, 0.35351563
      %v384 = vmul.f32 %v380, 0.35351563
      %v385 = vmul.f32 %v381, 0.35351563
      %v386 = vmul.f32 %v382, 0.35351563
      %v387 = vpack.c.bf16 %v384, %v383
      %v388 = vpack.c.bf16 %v386, %v385
      %v389 = vld [vmem:[%s324] sm:$0xf]
      %v390 = vld [vmem:[%s324 + $0x4] sm:$0xf]
      %v391 = vld [vmem:[%s338] sm:$0xf]
      %v392 = vld [vmem:[%s338 + $0x4] sm:$0xf]
      %v395 = vunpack.c.l.b16 %v389
      %v396 = vunpack.c.l.b16 %v390
      %v397 = vpack.c.b16 %v396, %v395
      %vm398 = vcmask 64512
      %v400 = vsel %vm398, %v387, 0
      %v403 = vsel %vm398, %v388, 0
      %v406 = vsel %vm398, %v397, 0
      %408 = vmatpush.bf16.xpose.msra.mxu0 0
      %409 = vmatpush.bf16.xpose.msra.mxu0 0
      %410 = vmatpush.bf16.xpose.msra.mxu0 0
      %411 = vmatpush.bf16.xpose.msra.mxu0 0
      %412 = vmatpush.bf16.xpose.msra.mxu0 0
      %413 = vmatpush.bf16.xpose.msra.mxu0 0
      %414 = vmatpush.bf16.xpose.msra.mxu0 0
      %415 = vmatpush.bf16.xpose.msra.mxu0 %v406
      %416 = vmatmul.bf16.gmra.mxu0 %v400
      %v417 = vpop.f32.mrf.mxu0
      %v418 = vadd.f32 0.0, %v417
      %v419 = vpop.f32.mrf.mxu0
      %v420 = vadd.f32 0.0, %v419
      %421 = vmatmul.bf16.gmra.mxu0 %v403
      %v422 = vpop.f32.mrf.mxu0
      %v423 = vadd.f32 0.0, %v422
      %v424 = vpop.f32.mrf.mxu0
      %v425 = vadd.f32 0.0, %v424
      %426 = vdwg.mxu0
      %s427 = smul.u32 %s23, 16
      %v428 = vlaneseq
      %v429 = vand.u32 %v428, 127
      %v430 = vstv %s427
      %v431 = vadd.s32 %v430, %v429
      %vm432 = vcmp.lt.s32.totalorder %v431, 12
      %v433 = vsel %vm432, %v418, -1e+30
      %v434 = vsel %vm432, %v420, -1e+30
      %v435 = vsel %vm432, %v423, -1e+30
      %v436 = vsel %vm432, %v425, -1e+30
      %v437 = vld [vmem:[#allocation2] sm:$0xff]
      %v438 = vld [vmem:[#allocation2 + $0x8] sm:$0xff]
      %v439 = vld [vmem:[#allocation2 + $0x10] sm:$0xff]
      %v440 = vld [vmem:[#allocation2 + $0x18] sm:$0xff]
      %vm441 = vcmask 130048
      %v442 = vsel %vm441, %v433, -inf
      %443 = vmax.xlane.f32.xlu0 %v442
      %v444 = vpop.xlane.xlu0 %443
      %v445 = vsel %vm441, %v434, -inf
      %446 = vmax.xlane.f32.xlu0 %v445
      %v447 = vpop.xlane.xlu0 %446
      %v448 = vsel %vm441, %v435, -inf
      %449 = vmax.xlane.f32.xlu0 %v448
      %v450 = vpop.xlane.xlu0 %449
      %v451 = vsel %vm441, %v436, -inf
      %452 = vmax.xlane.f32.xlu0 %v451
      %v453 = vpop.xlane.xlu0 %452
      %v454 = vmax.f32 %v437, %v444
      %v455 = vmax.f32 %v438, %v447
      %v456 = vmax.f32 %v439, %v450
      %v457 = vmax.f32 %v440, %v453
      %v458 = vsub.f32 %v437, %v454
      %v459 = vsub.f32 %v438, %v455
      %v460 = vsub.f32 %v439, %v456
      %v461 = vsub.f32 %v440, %v457
      %v462 = vmul.f32 %v458, 1.442695
      %v463 = vpow.pop %v462
      %v464 = vmul.f32 %v459, 1.442695
      %v465 = vpow.pop %v464
      %v466 = vmul.f32 %v460, 1.442695
      %v467 = vpow.pop %v466
      %v468 = vmul.f32 %v461, 1.442695
      %v469 = vpow.pop %v468
      %471 = vset.pattern.permute.xlu0 0
      %472 = vperm.xlu0 %471, %v454
      %v473 = vpop.permute.xlu0 %472
      %476 = vset.pattern.permute.xlu0 0
      %477 = vperm.xlu0 %476, %v455
      %v478 = vpop.permute.xlu0 %477
      %481 = vset.pattern.permute.xlu0 0
      %482 = vperm.xlu0 %481, %v456
      %v483 = vpop.permute.xlu0 %482
      %486 = vset.pattern.permute.xlu0 0
      %487 = vperm.xlu0 %486, %v457
      %v488 = vpop.permute.xlu0 %487
      %v490 = vsub.f32 %v433, %v473
      %v491 = vsub.f32 %v434, %v478
      %v492 = vsub.f32 %v435, %v483
      %v493 = vsub.f32 %v436, %v488
      %v494 = vmul.f32 %v490, 1.442695
      %v495 = vpow.pop %v494
      %v496 = vmul.f32 %v491, 1.442695
      %v497 = vpow.pop %v496
      %v498 = vmul.f32 %v492, 1.442695
      %v499 = vpow.pop %v498
      %v500 = vmul.f32 %v493, 1.442695
      %v501 = vpow.pop %v500
      %v502 = vld [vmem:[#allocation3] sm:$0xff]
      %v503 = vld [vmem:[#allocation3 + $0x8] sm:$0xff]
      %v504 = vld [vmem:[#allocation3 + $0x10] sm:$0xff]
      %v505 = vld [vmem:[#allocation3 + $0x18] sm:$0xff]
      %v506 = vmul.f32 %v463, %v502
      %v507 = vmul.f32 %v465, %v503
      %v508 = vmul.f32 %v467, %v504
      %v509 = vmul.f32 %v469, %v505
      %v510 = vsel %vm441, %v495, 0.0
      %511 = vadd.xlane.f32.xlu0 %v510
      %v512 = vpop.xlane.xlu0 %511
      %v513 = vsel %vm441, %v497, 0.0
      %514 = vadd.xlane.f32.xlu0 %v513
      %v515 = vpop.xlane.xlu0 %514
      %v516 = vsel %vm441, %v499, 0.0
      %517 = vadd.xlane.f32.xlu0 %v516
      %v518 = vpop.xlane.xlu0 %517
      %v519 = vsel %vm441, %v501, 0.0
      %520 = vadd.xlane.f32.xlu0 %v519
      %v521 = vpop.xlane.xlu0 %520
      %v522 = vadd.f32 %v506, %v512
      %v523 = vadd.f32 %v507, %v515
      %v524 = vadd.f32 %v508, %v518
      %v525 = vadd.f32 %v509, %v521
      %vm526 = vcmask 7168
      %527 = vst.msk [vmem:[#allocation3] sm:$0xff] %vm526, %v522
      %528 = vst.msk [vmem:[#allocation3 + $0x8] sm:$0xff] %vm526, %v523
      %529 = vst.msk [vmem:[#allocation3 + $0x10] sm:$0xff] %vm526, %v524
      %530 = vst.msk [vmem:[#allocation3 + $0x18] sm:$0xff] %vm526, %v525
      %v531 = vld [vmem:[#allocation4] sm:$0xff]
      %v532 = vld [vmem:[#allocation4 + $0x8] sm:$0xff]
      %v533 = vld [vmem:[#allocation4 + $0x10] sm:$0xff]
      %v534 = vld [vmem:[#allocation4 + $0x18] sm:$0xff]
      %536 = vset.pattern.permute.xlu0 0
      %537 = vperm.xlu0 %536, %v463
      %v538 = vpop.permute.xlu0 %537
      %541 = vset.pattern.permute.xlu0 0
      %542 = vperm.xlu0 %541, %v465
      %v543 = vpop.permute.xlu0 %542
      %546 = vset.pattern.permute.xlu0 0
      %547 = vperm.xlu0 %546, %v467
      %v548 = vpop.permute.xlu0 %547
      %551 = vset.pattern.permute.xlu0 0
      %552 = vperm.xlu0 %551, %v469
      %v553 = vpop.permute.xlu0 %552
      %v555 = vmul.f32 %v538, %v531
      %v556 = vmul.f32 %v543, %v532
      %v557 = vmul.f32 %v548, %v533
      %v558 = vmul.f32 %v553, %v534
      %v559 = vpack.c.bf16 %v497, %v495
      %v560 = vpack.c.bf16 %v501, %v499
      %v563 = vunpack.c.l.b16 %v391
      %v564 = vunpack.c.l.b16 %v392
      %v565 = vpack.c.b16 %v564, %v563
      %v568 = vsel %vm441, %v559, 0
      %v571 = vsel %vm441, %v560, 0
      %573 = vmatpush.bf16.msra.mxu0 0
      %574 = vmatpush.bf16.msra.mxu0 0
      %575 = vmatpush.bf16.msra.mxu0 0
      %576 = vmatpush.bf16.msra.mxu0 0
      %577 = vmatpush.bf16.msra.mxu0 0
      %578 = vmatpush.bf16.msra.mxu0 0
      %579 = vmatpush.bf16.msra.mxu0 0
      %580 = vmatpush.bf16.msra.mxu0 %v565
      %581 = vmatmul.bf16.gmra.mxu0 %v568
      %v582 = vpop.f32.mrf.mxu0
      %v583 = vadd.f32 0.0, %v582
      %v584 = vpop.f32.mrf.mxu0
      %v585 = vadd.f32 0.0, %v584
      %586 = vmatmul.bf16.gmra.mxu0 %v571
      %v587 = vpop.f32.mrf.mxu0
      %v588 = vadd.f32 0.0, %v587
      %v589 = vpop.f32.mrf.mxu0
      %v590 = vadd.f32 0.0, %v589
      %591 = vdwg.mxu0
      %v592 = vadd.f32 %v555, %v583
      %v593 = vadd.f32 %v556, %v585
      %v594 = vadd.f32 %v557, %v588
      %v595 = vadd.f32 %v558, %v590
      %596 = vst.msk [vmem:[#allocation4] sm:$0xff] %vm398, %v592
      %597 = vst.msk [vmem:[#allocation4 + $0x8] sm:$0xff] %vm398, %v593
      %598 = vst.msk [vmem:[#allocation4 + $0x10] sm:$0xff] %vm398, %v594
      %599 = vst.msk [vmem:[#allocation4 + $0x18] sm:$0xff] %vm398, %v595
      %600 = vst.msk [vmem:[#allocation2] sm:$0xff] %vm526, %v454
      %601 = vst.msk [vmem:[#allocation2 + $0x8] sm:$0xff] %vm526, %v455
      %602 = vst.msk [vmem:[#allocation2 + $0x10] sm:$0xff] %vm526, %v456
      %603 = vst.msk [vmem:[#allocation2 + $0x18] sm:$0xff] %vm526, %v457
      // Predicated region
      $region37: #{forward.4} parent=31 // pred_check
        %p604 = pneg %p357
      $region38: #{forward.4} parent=31 // pred_check_branch
        %606 = sbr.rel (%p604) target = $region40
      $region39: #{forward.4} parent=31 // pred_region
        %v607 = vld [vmem:[#allocation4] sm:$0xff]
        %v608 = vld [vmem:[#allocation4 + $0x8] sm:$0xff]
        %v609 = vld [vmem:[#allocation4 + $0x10] sm:$0xff]
        %v610 = vld [vmem:[#allocation4 + $0x18] sm:$0xff]
        %v611 = vld [vmem:[#allocation3] sm:$0xff]
        %v612 = vld [vmem:[#allocation3 + $0x8] sm:$0xff]
        %v613 = vld [vmem:[#allocation3 + $0x10] sm:$0xff]
        %v614 = vld [vmem:[#allocation3 + $0x18] sm:$0xff]
        %v615 = vrcp.pop %v611
        %v616 = vrcp.pop %v612
        %v617 = vrcp.pop %v613
        %v618 = vrcp.pop %v614
        %620 = vset.pattern.permute.xlu0 0
        %621 = vperm.xlu0 %620, %v615
        %v622 = vpop.permute.xlu0 %621
        %625 = vset.pattern.permute.xlu0 0
        %626 = vperm.xlu0 %625, %v616
        %v627 = vpop.permute.xlu0 %626
        %630 = vset.pattern.permute.xlu0 0
        %631 = vperm.xlu0 %630, %v617
        %v632 = vpop.permute.xlu0 %631
        %635 = vset.pattern.permute.xlu0 0
        %636 = vperm.xlu0 %635, %v618
        %v637 = vpop.permute.xlu0 %636
        %v639 = vmul.f32 %v607, %v622
        %v640 = vmul.f32 %v608, %v627
        %v641 = vmul.f32 %v609, %v632
        %v642 = vmul.f32 %v610, %v637
        %v643 = vpack.c.bf16 %v639, %v639
        %v644 = vpack.c.bf16 %v640, %v640
        %v645 = vpack.c.bf16 %v641, %v641
        %v646 = vpack.c.bf16 %v642, %v642
        %vm647 = vcmask 60416
        %648 = vst.msk [vmem:[%s353] sm:$0xf] %vm647, %v643
        %649 = vst.msk [vmem:[%s353 + $0x4] sm:$0xf] %vm647, %v644
        %650 = vst.msk [vmem:[%s353 + $0x8] sm:$0xf] %vm647, %v645
        %651 = vst.msk [vmem:[%s353 + $0xc] sm:$0xf] %vm647, %v646
      $region40: #{forward.4} parent=31 // pred_fallthru
        _
      %s652 = smul.u32 2, %s21
      %s653 = smul.u32 2, %s22
      %p654 = scmp.lt.s32.totalorder %s20, 1
      %s655 = scalar_select %p654, %s20, 1
      %p656 = scmp.lt.s32.totalorder %s652, 3
      %s657 = scalar_select %p656, %s652, 3
      %p658 = scmp.lt.s32.totalorder %s653, 1
      %s659 = scalar_select %p658, %s653, 1
      %s660 = smul.addr %s657, 2
      %s661 = sadd.s32 %s659, %s660
      %s662 = smul.addr %s655, 8
      %s663 = sadd.s32 %s661, %s662
      %s664 = smul.addr %s663, 4
      %s665 = scalar_lea.vmem %s3, %s664
      // Predicated region
      $region41: #{forward.4} parent=31 // pred_check
        %p666 = pneg %p152
      $region42: #{forward.4} parent=31 // pred_check_branch
        %668 = sbr.rel (%p666) target = $region44
      $region43: #{forward.4} parent=31 // pred_region
        %s669 = smul.u32 2, %s21
        %s670 = smul.u32 2, %s22
      $region44: #{forward.4} parent=31 // pred_fallthru
        _
    $region32: #{forward.4} parent=5 // pred_fallthru
      _
    %p671 = scmp.le.s32.totalorder 2, %s9
    // Predicated region
    $region45: #{forward.4} parent=5 // pred_check
      %p672 = pneg %p671
    $region46: #{forward.4} parent=5 // pred_check_branch
      %674 = sbr.rel (%p672) target = $region48
    $region47: #{forward.4} parent=5 // pred_region
      %s675 = ssub.s32 %s9, 2
      // Predicated region
      $region49: #{forward.4} parent=47 // pred_check
        %p676 = pneg %p158
      $region50: #{forward.4} parent=47 // pred_check_branch
        %678 = sbr.rel (%p676) target = $region52
      $region51: #{forward.4} parent=47 // pred_region
        %s679 = smul.u32 2, %s25
        %s680 = smul.u32 2, %s26
        %p681 = scmp.lt.s32.totalorder %s24, 1
        %s682 = scalar_select %p681, %s24, 1
        %p683 = scmp.lt.s32.totalorder %s679, 3
        %s684 = scalar_select %p683, %s679, 3
        %p685 = scmp.lt.s32.totalorder %s680, 1
        %s686 = scalar_select %p685, %s680, 1
        %s687 = smul.addr %s684, 2
        %s688 = sadd.s32 %s686, %s687
        %s689 = smul.addr %s682, 8
        %s690 = sadd.s32 %s688, %s689
        %s691 = smul.addr %s690, 4
        %s692 = scalar_lea.vmem %s3, %s691
      $region52: #{forward.4} parent=47 // pred_fallthru
        _
    $region48: #{forward.4} parent=5 // pred_fallthru
      _
  $region6: #{forward.4} parent=0 // loop_footer
    %s13 = sadd.s32 1, %s9
  $region7: #{forward.4} parent=0 // loop_footer_branch
    %8 = sbr.rel target = $region3
  $region8: #{forward.4} parent=0 // loop_exit
    _

</llo_original>
